<compile_context>
chip_gen: v6e
topology: v6e:2x2x1
jax: 0.10.0
libtpu: 0.0.40
codegen_flags: <defaults>
</compile_context>

<pallas_src>
import functools

import jax
import jax.numpy as jnp
from jax import lax
from jax.experimental import pallas as pl
from jax.experimental.pallas import tpu as pltpu

H = W = 7
N_TOK = H * W          # 49 spatial positions
N_PAD = 56             # per-image row stride, padded to a multiple of 8 sublanes


# --------------------------------------------------------------------------- #
# Kernel
# --------------------------------------------------------------------------- #
def modulated_att_kernel(x_ref, satt_ref, wqkv_ref, bqkv_ref, wm_ref,
                         out_ref, *mask_refs, ic, n_pad, n_real, emit_mask):
    rows, c = x_ref.shape
    bb = rows // n_pad

    x2 = x_ref[...]                                              # [bb*56, C] f32

    # ---- fused g|theta|phi projection: one MXU matmul, f32 accumulation ----
    w_dt = wqkv_ref.dtype
    qkv = jnp.dot(x2.astype(w_dt), wqkv_ref[...],
                  preferred_element_type=jnp.float32) + bqkv_ref[...]   # [bb*56, 3*IC]

    # ---- batched embedded-gaussian attention on a 3D view -------------------
    # 56 % 8 == 0, so these reshapes do not cross (8,128) tile boundaries.
    qkv3 = qkv.reshape(bb, n_pad, 3 * ic)
    g = qkv3[:, :, 0:ic]
    t = qkv3[:, :, ic:2 * ic]
    p = qkv3[:, :, 2 * ic:3 * ic]

    s = jnp.einsum("bni,bmi->bnm", t, p,
                   preferred_element_type=jnp.float32)           # [bb, 56, 56]
    # mask out the 7 padded key positions (m >= 49) before the softmax
    key_ok = lax.broadcasted_iota(jnp.int32, s.shape, 2) < n_real
    s = jnp.where(key_ok, s, -1e30)
    s = s - jnp.max(s, axis=-1, keepdims=True)
    e = jnp.exp(s)
    attn = e * pl.reciprocal(jnp.sum(e, axis=-1, keepdims=True), approx=True)
    mapped = jnp.einsum("bnm,bmi->bni", attn, g,
                        preferred_element_type=jnp.float32)      # [bb, 56, IC]

    # ---- conv_mask (1x1 conv, no bias) + modulation + residual --------------
    mask2 = jnp.dot(mapped.reshape(bb * n_pad, ic).astype(wm_ref.dtype),
                    wm_ref[...],
                    preferred_element_type=jnp.float32)          # [bb*56, C]
    out_ref[...] = satt_ref[...] * mask2 + x2
    if emit_mask:
        mask_refs[0][...] = mask2


# --------------------------------------------------------------------------- #
# Wrapper
# --------------------------------------------------------------------------- #
def _round_up(a, b):
    return (a + b - 1) // b * b


@functools.partial(
    jax.jit,
    static_argnames=("block_b", "weight_dtype", "return_mask",
                     "single_buffer_weights"))
def modulated_att_forward(x_nchw, params, *, block_b=None,
                          weight_dtype=jnp.bfloat16, return_mask=True,
                          single_buffer_weights=True):
    B, C, Hh, Ww = x_nchw.shape
    assert (Hh, Ww) == (H, W), "fc_spatial expects a 7x7 spatial map"
    IC = params["wg"].shape[1]
    N = N_TOK
    NP = N_PAD

    # ---- fc_spatial hoisted to XLA (torch NCHW-flatten order is a free view) --
    logits = x_nchw.reshape(B, C * N) @ params["wfc"].T + params["bfc"]   # [B, 49]
    satt = jax.nn.softmax(logits, axis=-1)

    # ---- batch blocking -------------------------------------------------------
    if block_b is None:
        # BB*56 = 280 rows aligns reasonably with 256-wide MXU row tiles and keeps
        # >= 2 grid blocks for B > 5 so the "parallel" grid axis feeds both v7x TCs.
        block_b = B if B <= 5 else (5 if B <= 20 else 10)
    BB = block_b
    B_pad = _round_up(B, BB)
    nblk = B_pad // BB

    # ---- token-major activations, per-image rows padded 49 -> 56 -------------
    # NOTE: NCHW <-> token-major transposes are unavoidable layout churn given the
    # module's NCHW interface; keep activations in [B, N, C] across layers if possible.
    x_tok = jnp.transpose(x_nchw.reshape(B, C, N), (0, 2, 1))             # [B, 49, C]
    x_tok = jnp.pad(x_tok, ((0, B_pad - B), (0, NP - N), (0, 0)))
    x_rows = x_tok.reshape(B_pad * NP, C)
    satt_rows = jnp.pad(satt, ((0, B_pad - B), (0, NP - N))).reshape(B_pad * NP, 1)

    # ---- fused g|theta|phi weights (contiguous IC-wide segments, no 128-lane
    #      padding: avoids 3x wasted lanes when IC < 128) -----------------------
    wqkv = jnp.concatenate([params["wg"], params["wt"], params["wp"]],
                           axis=1).astype(weight_dtype)                    # [C, 3*IC]
    bqkv = jnp.concatenate([params["bg"], params["bt"], params["bp"]],
                           axis=1).astype(jnp.float32)                     # [1, 3*IC]
    wm = params["wm"].astype(weight_dtype)                                 # [IC, C]

    def wspec(shape):
        if single_buffer_weights:
            return pl.BlockSpec(shape, lambda i: (0, 0),
                                pipeline_mode=pl.Buffered(1))
        return pl.BlockSpec(shape, lambda i: (0, 0))

    kern = functools.partial(modulated_att_kernel, ic=IC, n_pad=NP,
                             n_real=N, emit_mask=return_mask)

    out_shapes = [jax.ShapeDtypeStruct((B_pad * NP, C), jnp.float32)]
    out_specs = [pl.BlockSpec((BB * NP, C), lambda i: (i, 0))]
    if return_mask:
        out_shapes.append(jax.ShapeDtypeStruct((B_pad * NP, C), jnp.float32))
        out_specs.append(pl.BlockSpec((BB * NP, C), lambda i: (i, 0)))

    results = pl.pallas_call(
        kern,
        out_shape=tuple(out_shapes),
        grid_spec=pltpu.PrefetchScalarGridSpec(
            num_scalar_prefetch=0,
            grid=(nblk,),
            in_specs=[
                pl.BlockSpec((BB * NP, C), lambda i: (i, 0)),    # x rows (token-major)
                pl.BlockSpec((BB * NP, 1), lambda i: (i, 0)),    # spatial att column
                wspec((C, 3 * IC)),                              # fused g|theta|phi
                wspec((1, 3 * IC)),                              # fused biases
                wspec((IC, C)),                                  # conv_mask weight
            ],
            out_specs=tuple(out_specs),
        ),
        compiler_params=pltpu.CompilerParams(
            dimension_semantics=("parallel",),
            vmem_limit_bytes=40 * 1024 * 1024,
        ),
    )(x_rows, satt_rows, wqkv, bqkv, wm)

    out3 = results[0].reshape(B_pad, NP, C)[:B, :N, :]
    final_nchw = jnp.transpose(out3, (0, 2, 1)).reshape(B, C, Hh, Ww)
    satt_exp = jnp.broadcast_to(satt.reshape(B, 1, Hh, Ww), (B, C, Hh, Ww))
    if return_mask:
        mask3 = results[1].reshape(B_pad, NP, C)[:B, :N, :]
        mask_nchw = jnp.transpose(mask3, (0, 2, 1)).reshape(B, C, Hh, Ww)
    else:
        mask_nchw = None
    return final_nchw, [x_nchw, satt_exp, mask_nchw]


# --------------------------------------------------------------------------- #
# Parameters / reference
# --------------------------------------------------------------------------- #
def init_params(key, in_channels, reduction=2):
    """Deterministic parameter init (shapes follow the PyTorch module)."""
    C = in_channels
    IC = C // reduction
    M = C * N_TOK
    ks = jax.random.split(key, 9)
    std = (2.0 / C) ** 0.5  # kaiming_normal_ for 1x1 conv, fan_in = C
    return dict(
        wg=jax.random.normal(ks[0], (C, IC), jnp.float32) * std,
        bg=jax.random.normal(ks[1], (1, IC), jnp.float32) * 0.01,   # module zero-inits; nonzero exercises the path
        wt=jax.random.normal(ks[2], (C, IC), jnp.float32) * std,
        bt=jax.random.normal(ks[3], (1, IC), jnp.float32) * 0.01,
        wp=jax.random.normal(ks[4], (C, IC), jnp.float32) * std,
        bp=jax.random.normal(ks[5], (1, IC), jnp.float32) * 0.01,
        # module zero-inits conv_mask; small nonzero values exercise the path
        wm=jax.random.normal(ks[6], (IC, C), jnp.float32) * 0.02,
        # fc_spatial weight [49, 49*C] in torch's NCHW-flatten (channel-major) order
        wfc=jax.random.normal(ks[7], (N_TOK, M), jnp.float32) * (1.0 / M) ** 0.5,
        bfc=jax.random.normal(ks[8], (N_TOK,), jnp.float32) * 0.01,
    )


def reference_forward(x_nchw, params):
    """Pure-JAX reference replicating the PyTorch forward exactly (f32)."""
    B, C, Hh, Ww = x_nchw.shape
    N = Hh * Ww
    xs = jnp.transpose(x_nchw.reshape(B, C, N), (0, 2, 1))       # [B, N, C]
    g = xs @ params["wg"] + params["bg"]
    t = xs @ params["wt"] + params["bt"]
    p = xs @ params["wp"] + params["bp"]
    s = jnp.einsum("bni,bmi->bnm", t, p)
    attn = jax.nn.softmax(s, axis=-1)
    mapped = attn @ g
    mask = mapped @ params["wm"]                                  # [B, N, C]
    xflat = x_nchw.reshape(B, -1)                                 # NCHW order (torch view)
    logits = xflat @ params["wfc"].T + params["bfc"]
    satt = jax.nn.softmax(logits, axis=-1)                        # [B, N]
    out = satt[:, :, None] * mask + xs
    final = jnp.transpose(out, (0, 2, 1)).reshape(B, C, Hh, Ww)
    mask_nchw = jnp.transpose(mask, (0, 2, 1)).reshape(B, C, Hh, Ww)
    satt_exp = jnp.broadcast_to(satt.reshape(B, 1, Hh, Ww), (B, C, Hh, Ww))
    return final, [x_nchw, satt_exp, mask_nchw]


# --------------------------------------------------------------------------- #
# Test harness
# --------------------------------------------------------------------------- #
_SINGLE_BUFFER_OK = [True]


def _forward(x, params, **kw):
    """Forward with graceful fallback if pl.Buffered(1) single-buffering is unsupported."""
    if _SINGLE_BUFFER_OK[0]:
        try:
            return modulated_att_forward(x, params, single_buffer_weights=True, **kw)
        except Exception:
            _SINGLE_BUFFER_OK[0] = False
    return modulated_att_forward(x, params, single_buffer_weights=False, **kw)


def _check(x, params, *, weight_dtype, atol, rtol):
    final, feats = _forward(x, params, weight_dtype=weight_dtype)
    jax.block_until_ready(final)
    final_ref, feats_ref = reference_forward(x, params)
    assert jnp.allclose(final, final_ref, atol=atol, rtol=rtol), "final mismatch"
    assert jnp.allclose(feats[1], feats_ref[1], atol=1e-5, rtol=1e-4), "spatial att mismatch"
    assert jnp.allclose(feats[2], feats_ref[2], atol=atol, rtol=rtol), "mask mismatch"


if __name__ == "__main__":
    key = jax.random.PRNGKey(0)
    k_x1, k_p1, k_x2, k_p2 = jax.random.split(key, 4)

    # Case 1: tiny, f32 weights, single grid block (B=2 -> BB=2). C=16, IC=8.
    x1 = jax.random.normal(k_x1, (2, 16, H, W), jnp.float32)
    p1 = init_params(k_p1, 16, reduction=2)
    _check(x1, p1, weight_dtype=jnp.float32, atol=5e-3, rtol=5e-3)

    # Case 2: multi-block grid with batch + token padding, bf16 weights
    # (B=12 -> BB=5, B_pad=15, 3 grid steps). C=32, IC=16.
    x2 = jax.random.normal(k_x2, (12, 32, H, W), jnp.float32)
    p2 = init_params(k_p2, 32, reduction=2)
    _check(x2, p2, weight_dtype=jnp.bfloat16, atol=5e-2, rtol=5e-2)

    # Case 3: mask feature-map output disabled -> single output block (half writeback).
    final3, feats3 = _forward(x1, p1, weight_dtype=jnp.float32, return_mask=False)
    jax.block_until_ready(final3)
    final_ref1, _ = reference_forward(x1, p1)
    assert feats3[2] is None
    assert jnp.allclose(final3, final_ref1, atol=5e-3, rtol=5e-3), "final mismatch (no-mask path)"

    print("KERNEL_OK")
</pallas_src>

<mosaic_0001>
module attributes {stable_mosaic.version = 11 : i64} {
  func.func @modulated_att_kernel(%arg0: i32, %arg1: memref<112x16xf32, #tpu.memory_space<vmem>>, %arg2: memref<112x1xf32, #tpu.memory_space<vmem>>, %arg3: memref<16x24xf32, #tpu.memory_space<vmem>>, %arg4: memref<1x24xf32, #tpu.memory_space<vmem>>, %arg5: memref<8x16xf32, #tpu.memory_space<vmem>>, %arg6: memref<112x16xf32, #tpu.memory_space<vmem>>, %arg7: memref<112x16xf32, #tpu.memory_space<vmem>>) attributes {dimension_semantics = [#tpu.dimension_semantics<parallel>], iteration_bounds = array<i64: 1>, scalar_prefetch = 0 : i64, scratch_operands = 0 : i64, tpu.core_type = #tpu.core_type<tc>, window_params = [{transform_indices = @transform_0, window_bounds = array<i64: 112, 16>}, {transform_indices = @transform_1, window_bounds = array<i64: 112, 1>}, {pipeline_mode = #tpu.pipeline_mode<synchronous>, transform_indices = @transform_2, window_bounds = array<i64: 16, 24>}, {pipeline_mode = #tpu.pipeline_mode<synchronous>, transform_indices = @transform_3, window_bounds = array<i64: 1, 24>}, {pipeline_mode = #tpu.pipeline_mode<synchronous>, transform_indices = @transform_4, window_bounds = array<i64: 8, 16>}, {transform_indices = @transform_5, window_bounds = array<i64: 112, 16>}, {transform_indices = @transform_6, window_bounds = array<i64: 112, 16>}]} {
    %c0 = arith.constant 0 : index
    %c0_0 = arith.constant 0 : index
    %0 = vector.load %arg1[%c0, %c0_0] : memref<112x16xf32, #tpu.memory_space<vmem>>, vector<112x16xf32>
    %c0_1 = arith.constant 0 : index
    %c0_2 = arith.constant 0 : index
    %1 = vector.load %arg3[%c0_1, %c0_2] : memref<16x24xf32, #tpu.memory_space<vmem>>, vector<16x24xf32>
    %cst = arith.constant dense<0.000000e+00> : vector<112x24xf32>
    %2 = tpu.matmul %0, %1, %cst {dimension_numbers = #tpu.dot_dimension_numbers<[1], [0], [0], [1], [0, 0, 1, 1], [], []>} : vector<112x16xf32>, vector<16x24xf32>, vector<112x24xf32> -> vector<112x24xf32>
    %c0_3 = arith.constant 0 : index
    %c0_4 = arith.constant 0 : index
    %3 = vector.load %arg4[%c0_3, %c0_4] : memref<1x24xf32, #tpu.memory_space<vmem>>, vector<1x24xf32>
    %4 = vector.broadcast %3 : vector<1x24xf32> to vector<112x24xf32>
    %5 = arith.addf %2, %4 : vector<112x24xf32>
    %6 = vector.shape_cast %5 : vector<112x24xf32> to vector<2x56x24xf32>
    %7 = vector.extract_strided_slice %6 {offsets = [0, 0, 0], sizes = [2, 56, 8], strides = [1, 1, 1]} : vector<2x56x24xf32> to vector<2x56x8xf32>
    %8 = vector.extract_strided_slice %6 {offsets = [0, 0, 8], sizes = [2, 56, 8], strides = [1, 1, 1]} : vector<2x56x24xf32> to vector<2x56x8xf32>
    %9 = vector.extract_strided_slice %6 {offsets = [0, 0, 16], sizes = [2, 56, 8], strides = [1, 1, 1]} : vector<2x56x24xf32> to vector<2x56x8xf32>
    "tpu.trace_start"() <{level = 10 : i32, message = "bni,bmi->bnm"}> : () -> ()
    %cst_5 = arith.constant dense<0.000000e+00> : vector<2x56x56xf32>
    %10 = tpu.matmul %8, %9, %cst_5 {dimension_numbers = #tpu.dot_dimension_numbers<[2], [2], [1], [1], [0, 0, 0, 1, 1, 1], [0], [0]>} : vector<2x56x8xf32>, vector<2x56x8xf32>, vector<2x56x56xf32> -> vector<2x56x56xf32>
    "tpu.trace_stop"() : () -> ()
    %11 = tpu.iota {dimensions = array<i32: 2>} : vector<2x56x56xi32>
    %c49_i32 = arith.constant 49 : i32
    %12 = vector.broadcast %c49_i32 : i32 to vector<2x56x56xi32>
    %13 = arith.cmpi slt, %11, %12 : vector<2x56x56xi32>
    %cst_6 = arith.constant -1.000000e+30 : f32
    %14 = vector.broadcast %cst_6 : f32 to vector<2x56x56xf32>
    %15 = arith.select %13, %10, %14 : vector<2x56x56xi1>, vector<2x56x56xf32>
    %cst_7 = arith.constant dense<0xFF800000> : vector<2x56xf32>
    %16 = vector.multi_reduction <maximumf>, %15, %cst_7 [2] : vector<2x56x56xf32> to vector<2x56xf32>
    %17 = vector.shape_cast %16 : vector<2x56xf32> to vector<2x56x1xf32>
    %18 = vector.broadcast %17 : vector<2x56x1xf32> to vector<2x56x56xf32>
    %19 = arith.subf %15, %18 : vector<2x56x56xf32>
    %20 = math.exp %19 : vector<2x56x56xf32>
    %cst_8 = arith.constant dense<0.000000e+00> : vector<2x56xf32>
    %21 = vector.multi_reduction <add>, %20, %cst_8 [2] : vector<2x56x56xf32> to vector<2x56xf32>
    %22 = vector.shape_cast %21 : vector<2x56xf32> to vector<2x56x1xf32>
    %23 = tpu.reciprocal %22 {approx = true} : vector<2x56x1xf32> -> vector<2x56x1xf32>
    %24 = vector.broadcast %23 : vector<2x56x1xf32> to vector<2x56x56xf32>
    %25 = arith.mulf %20, %24 : vector<2x56x56xf32>
    "tpu.trace_start"() <{level = 10 : i32, message = "bnm,bmi->bni"}> : () -> ()
    %cst_9 = arith.constant dense<0.000000e+00> : vector<2x56x8xf32>
    %26 = tpu.matmul %25, %7, %cst_9 {dimension_numbers = #tpu.dot_dimension_numbers<[2], [1], [1], [2], [0, 0, 0, 1, 1, 2], [0], [0]>} : vector<2x56x56xf32>, vector<2x56x8xf32>, vector<2x56x8xf32> -> vector<2x56x8xf32>
    "tpu.trace_stop"() : () -> ()
    %27 = vector.shape_cast %26 : vector<2x56x8xf32> to vector<112x8xf32>
    %c0_10 = arith.constant 0 : index
    %c0_11 = arith.constant 0 : index
    %28 = vector.load %arg5[%c0_10, %c0_11] : memref<8x16xf32, #tpu.memory_space<vmem>>, vector<8x16xf32>
    %cst_12 = arith.constant dense<0.000000e+00> : vector<112x16xf32>
    %29 = tpu.matmul %27, %28, %cst_12 {dimension_numbers = #tpu.dot_dimension_numbers<[1], [0], [0], [1], [0, 0, 1, 1], [], []>} : vector<112x8xf32>, vector<8x16xf32>, vector<112x16xf32> -> vector<112x16xf32>
    %c0_13 = arith.constant 0 : index
    %c0_14 = arith.constant 0 : index
    %30 = vector.load %arg2[%c0_13, %c0_14] : memref<112x1xf32, #tpu.memory_space<vmem>>, vector<112x1xf32>
    %31 = vector.broadcast %30 : vector<112x1xf32> to vector<112x16xf32>
    %32 = arith.mulf %31, %29 : vector<112x16xf32>
    %33 = arith.addf %32, %0 : vector<112x16xf32>
    %c0_15 = arith.constant 0 : index
    %c0_16 = arith.constant 0 : index
    %34 = vector.load %arg6[%c0_15, %c0_16] : memref<112x16xf32, #tpu.memory_space<vmem>>, vector<112x16xf32>
    tpu.vector_store %arg6[%c0_15, %c0_16], %33 {strides = array<i32>} : memref<112x16xf32, #tpu.memory_space<vmem>>, vector<112x16xf32>,
    %c0_17 = arith.constant 0 : index
    %c0_18 = arith.constant 0 : index
    %35 = vector.load %arg7[%c0_17, %c0_18] : memref<112x16xf32, #tpu.memory_space<vmem>>, vector<112x16xf32>
    tpu.vector_store %arg7[%c0_17, %c0_18], %29 {strides = array<i32>} : memref<112x16xf32, #tpu.memory_space<vmem>>, vector<112x16xf32>,
    return
  }
  func.func @transform_0(%arg0: i32) -> (i32, i32) {
    %c0_i32 = arith.constant 0 : i32
    %c0_i32_0 = arith.constant 0 : i32
    return %arg0, %c0_i32 : i32, i32
  }
  func.func @transform_1(%arg0: i32) -> (i32, i32) {
    %c0_i32 = arith.constant 0 : i32
    %c0_i32_0 = arith.constant 0 : i32
    return %arg0, %c0_i32 : i32, i32
  }
  func.func @transform_2(%arg0: i32) -> (i32, i32) {
    %c0_i32 = arith.constant 0 : i32
    %c0_i32_0 = arith.constant 0 : i32
    %c0_i32_1 = arith.constant 0 : i32
    return %c0_i32, %c0_i32_0 : i32, i32
  }
  func.func @transform_3(%arg0: i32) -> (i32, i32) {
    %c0_i32 = arith.constant 0 : i32
    %c0_i32_0 = arith.constant 0 : i32
    %c0_i32_1 = arith.constant 0 : i32
    return %c0_i32, %c0_i32_0 : i32, i32
  }
  func.func @transform_4(%arg0: i32) -> (i32, i32) {
    %c0_i32 = arith.constant 0 : i32
    %c0_i32_0 = arith.constant 0 : i32
    %c0_i32_1 = arith.constant 0 : i32
    return %c0_i32, %c0_i32_0 : i32, i32
  }
  func.func @transform_5(%arg0: i32) -> (i32, i32) {
    %c0_i32 = arith.constant 0 : i32
    %c0_i32_0 = arith.constant 0 : i32
    return %arg0, %c0_i32 : i32, i32
  }
  func.func @transform_6(%arg0: i32) -> (i32, i32) {
    %c0_i32 = arith.constant 0 : i32
    %c0_i32_0 = arith.constant 0 : i32
    return %arg0, %c0_i32 : i32, i32
  }
}

module attributes {stable_mosaic.version = 11 : i64} {
  func.func @modulated_att_kernel(%arg0: i32, %arg1: memref<112x16xf32, #tpu.memory_space<vmem>>, %arg2: memref<112x1xf32, #tpu.memory_space<vmem>>, %arg3: memref<16x24xf32, #tpu.memory_space<vmem>>, %arg4: memref<1x24xf32, #tpu.memory_space<vmem>>, %arg5: memref<8x16xf32, #tpu.memory_space<vmem>>, %arg6: memref<112x16xf32, #tpu.memory_space<vmem>>, %arg7: memref<112x16xf32, #tpu.memory_space<vmem>>) attributes {dimension_semantics = [#tpu.dimension_semantics<parallel>], iteration_bounds = array<i64: 1>, scalar_prefetch = 0 : i64, scratch_operands = 0 : i64, tpu.core_type = #tpu.core_type<tc>, window_params = [{transform_indices = @transform_0, window_bounds = array<i64: 112, 16>}, {transform_indices = @transform_1, window_bounds = array<i64: 112, 1>}, {pipeline_mode = #tpu.pipeline_mode<synchronous>, transform_indices = @transform_2, window_bounds = array<i64: 16, 24>}, {pipeline_mode = #tpu.pipeline_mode<synchronous>, transform_indices = @transform_3, window_bounds = array<i64: 1, 24>}, {pipeline_mode = #tpu.pipeline_mode<synchronous>, transform_indices = @transform_4, window_bounds = array<i64: 8, 16>}, {transform_indices = @transform_5, window_bounds = array<i64: 112, 16>}, {transform_indices = @transform_6, window_bounds = array<i64: 112, 16>}]} {
    %c0 = arith.constant 0 : index
    %c0_0 = arith.constant 0 : index
    %0 = vector.load %arg1[%c0, %c0_0] : memref<112x16xf32, #tpu.memory_space<vmem>>, vector<112x16xf32>
    %c0_1 = arith.constant 0 : index
    %c0_2 = arith.constant 0 : index
    %1 = vector.load %arg3[%c0_1, %c0_2] : memref<16x24xf32, #tpu.memory_space<vmem>>, vector<16x24xf32>
    %cst = arith.constant dense<0.000000e+00> : vector<112x24xf32>
    %2 = tpu.matmul %0, %1, %cst {dimension_numbers = #tpu.dot_dimension_numbers<[1], [0], [0], [1], [0, 0, 1, 1], [], []>} : vector<112x16xf32>, vector<16x24xf32>, vector<112x24xf32> -> vector<112x24xf32>
    %c0_3 = arith.constant 0 : index
    %c0_4 = arith.constant 0 : index
    %3 = vector.load %arg4[%c0_3, %c0_4] : memref<1x24xf32, #tpu.memory_space<vmem>>, vector<1x24xf32>
    %4 = vector.broadcast %3 : vector<1x24xf32> to vector<112x24xf32>
    %5 = arith.addf %2, %4 : vector<112x24xf32>
    %6 = vector.shape_cast %5 : vector<112x24xf32> to vector<2x56x24xf32>
    %7 = vector.extract_strided_slice %6 {offsets = [0, 0, 0], sizes = [2, 56, 8], strides = [1, 1, 1]} : vector<2x56x24xf32> to vector<2x56x8xf32>
    %8 = vector.extract_strided_slice %6 {offsets = [0, 0, 8], sizes = [2, 56, 8], strides = [1, 1, 1]} : vector<2x56x24xf32> to vector<2x56x8xf32>
    %9 = vector.extract_strided_slice %6 {offsets = [0, 0, 16], sizes = [2, 56, 8], strides = [1, 1, 1]} : vector<2x56x24xf32> to vector<2x56x8xf32>
    "tpu.trace_start"() <{level = 10 : i32, message = "bni,bmi->bnm"}> : () -> ()
    %cst_5 = arith.constant dense<0.000000e+00> : vector<2x56x56xf32>
    %10 = tpu.matmul %8, %9, %cst_5 {dimension_numbers = #tpu.dot_dimension_numbers<[2], [2], [1], [1], [0, 0, 0, 1, 1, 1], [0], [0]>} : vector<2x56x8xf32>, vector<2x56x8xf32>, vector<2x56x56xf32> -> vector<2x56x56xf32>
    "tpu.trace_stop"() : () -> ()
    %11 = tpu.iota {dimensions = array<i32: 2>} : vector<2x56x56xi32>
    %c49_i32 = arith.constant 49 : i32
    %12 = vector.broadcast %c49_i32 : i32 to vector<2x56x56xi32>
    %13 = arith.cmpi slt, %11, %12 : vector<2x56x56xi32>
    %cst_6 = arith.constant -1.000000e+30 : f32
    %14 = vector.broadcast %cst_6 : f32 to vector<2x56x56xf32>
    %15 = arith.select %13, %10, %14 : vector<2x56x56xi1>, vector<2x56x56xf32>
    %cst_7 = arith.constant dense<0xFF800000> : vector<2x56xf32>
    %16 = vector.multi_reduction <maximumf>, %15, %cst_7 [2] : vector<2x56x56xf32> to vector<2x56xf32>
    %17 = vector.shape_cast %16 : vector<2x56xf32> to vector<2x56x1xf32>
    %18 = vector.broadcast %17 : vector<2x56x1xf32> to vector<2x56x56xf32>
    %19 = arith.subf %15, %18 : vector<2x56x56xf32>
    %20 = math.exp %19 : vector<2x56x56xf32>
    %cst_8 = arith.constant dense<0.000000e+00> : vector<2x56xf32>
    %21 = vector.multi_reduction <add>, %20, %cst_8 [2] : vector<2x56x56xf32> to vector<2x56xf32>
    %22 = vector.shape_cast %21 : vector<2x56xf32> to vector<2x56x1xf32>
    %23 = tpu.reciprocal %22 {approx = true} : vector<2x56x1xf32> -> vector<2x56x1xf32>
    %24 = vector.broadcast %23 : vector<2x56x1xf32> to vector<2x56x56xf32>
    %25 = arith.mulf %20, %24 : vector<2x56x56xf32>
    "tpu.trace_start"() <{level = 10 : i32, message = "bnm,bmi->bni"}> : () -> ()
    %cst_9 = arith.constant dense<0.000000e+00> : vector<2x56x8xf32>
    %26 = tpu.matmul %25, %7, %cst_9 {dimension_numbers = #tpu.dot_dimension_numbers<[2], [1], [1], [2], [0, 0, 0, 1, 1, 2], [0], [0]>} : vector<2x56x56xf32>, vector<2x56x8xf32>, vector<2x56x8xf32> -> vector<2x56x8xf32>
    "tpu.trace_stop"() : () -> ()
    %27 = vector.shape_cast %26 : vector<2x56x8xf32> to vector<112x8xf32>
    %c0_10 = arith.constant 0 : index
    %c0_11 = arith.constant 0 : index
    %28 = vector.load %arg5[%c0_10, %c0_11] : memref<8x16xf32, #tpu.memory_space<vmem>>, vector<8x16xf32>
    %cst_12 = arith.constant dense<0.000000e+00> : vector<112x16xf32>
    %29 = tpu.matmul %27, %28, %cst_12 {dimension_numbers = #tpu.dot_dimension_numbers<[1], [0], [0], [1], [0, 0, 1, 1], [], []>} : vector<112x8xf32>, vector<8x16xf32>, vector<112x16xf32> -> vector<112x16xf32>
    %c0_13 = arith.constant 0 : index
    %c0_14 = arith.constant 0 : index
    %30 = vector.load %arg2[%c0_13, %c0_14] : memref<112x1xf32, #tpu.memory_space<vmem>>, vector<112x1xf32>
    %31 = vector.broadcast %30 : vector<112x1xf32> to vector<112x16xf32>
    %32 = arith.mulf %31, %29 : vector<112x16xf32>
    %33 = arith.addf %32, %0 : vector<112x16xf32>
    %c0_15 = arith.constant 0 : index
    %c0_16 = arith.constant 0 : index
    %34 = vector.load %arg6[%c0_15, %c0_16] : memref<112x16xf32, #tpu.memory_space<vmem>>, vector<112x16xf32>
    tpu.vector_store %arg6[%c0_15, %c0_16], %33 {strides = array<i32>} : memref<112x16xf32, #tpu.memory_space<vmem>>, vector<112x16xf32>,
    %c0_17 = arith.constant 0 : index
    %c0_18 = arith.constant 0 : index
    %35 = vector.load %arg7[%c0_17, %c0_18] : memref<112x16xf32, #tpu.memory_space<vmem>>, vector<112x16xf32>
    tpu.vector_store %arg7[%c0_17, %c0_18], %29 {strides = array<i32>} : memref<112x16xf32, #tpu.memory_space<vmem>>, vector<112x16xf32>,
    return
  }
  func.func @transform_0(%arg0: i32) -> (i32, i32) {
    %c0_i32 = arith.constant 0 : i32
    %c0_i32_0 = arith.constant 0 : i32
    return %arg0, %c0_i32 : i32, i32
  }
  func.func @transform_1(%arg0: i32) -> (i32, i32) {
    %c0_i32 = arith.constant 0 : i32
    %c0_i32_0 = arith.constant 0 : i32
    return %arg0, %c0_i32 : i32, i32
  }
  func.func @transform_2(%arg0: i32) -> (i32, i32) {
    %c0_i32 = arith.constant 0 : i32
    %c0_i32_0 = arith.constant 0 : i32
    %c0_i32_1 = arith.constant 0 : i32
    return %c0_i32, %c0_i32_0 : i32, i32
  }
  func.func @transform_3(%arg0: i32) -> (i32, i32) {
    %c0_i32 = arith.constant 0 : i32
    %c0_i32_0 = arith.constant 0 : i32
    %c0_i32_1 = arith.constant 0 : i32
    return %c0_i32, %c0_i32_0 : i32, i32
  }
  func.func @transform_4(%arg0: i32) -> (i32, i32) {
    %c0_i32 = arith.constant 0 : i32
    %c0_i32_0 = arith.constant 0 : i32
    %c0_i32_1 = arith.constant 0 : i32
    return %c0_i32, %c0_i32_0 : i32, i32
  }
  func.func @transform_5(%arg0: i32) -> (i32, i32) {
    %c0_i32 = arith.constant 0 : i32
    %c0_i32_0 = arith.constant 0 : i32
    return %arg0, %c0_i32 : i32, i32
  }
  func.func @transform_6(%arg0: i32) -> (i32, i32) {
    %c0_i32 = arith.constant 0 : i32
    %c0_i32_0 = arith.constant 0 : i32
    return %arg0, %c0_i32 : i32, i32
  }
}

</mosaic_0001>

<llo_original>
// kernel: modulated_att_forward.1
$region0: #{modulated_att_forward.1}
  #allocation0 [shape = 'u32[]', space=smem, size = 0x4, offset = 0x4, fixed_abs, tag = 'smem constant byte address 0x4 - core index']
  #allocation1 [shape = 'u32[144,128]{1,0:T(1,128)}', space=vmem, size = 0x12000, scoped, tag = 'internal scratch']
  %s0 = inlined_call_operand.vmem [shape: f32[112,16], index: 0, kind: input, shape index: {}]
  %s1 = inlined_call_operand.vmem [shape: f32[112,1], index: 1, kind: input, shape index: {}]
  %s2 = inlined_call_operand.vmem [shape: f32[16,24], index: 2, kind: input, shape index: {}]
  %s3 = inlined_call_operand.vmem [shape: f32[1,24], index: 3, kind: input, shape index: {}]
  %s4 = inlined_call_operand.vmem [shape: f32[8,16], index: 4, kind: input, shape index: {}]
  %s5 = inlined_call_operand.vmem [shape: f32[112,16], index: 5, kind: output, shape index: {0}]
  %s6 = inlined_call_operand.vmem [shape: f32[112,16], index: 6, kind: output, shape index: {1}]
  %7 = xla_tuple %s5, %s6
  %s8 = sld [smem:[#allocation0]]
  $region38: #{modulated_att_forward.1} parent=0
    _
  %s10 = ssub.s32 1, %s8
  %s11 = scalar_select 0, %s10, %s8
  // Predicated region
  $region2: #{modulated_att_forward.1} parent=0 // pred_check
    _
  $region3: #{modulated_att_forward.1} parent=0 // pred_check_branch
    %13 = sbr.rel (0) target = $region5
  $region4: #{modulated_att_forward.1} parent=0 // pred_region
    _
  $region5: #{modulated_att_forward.1} parent=0 // pred_fallthru
    _
  // Predicated region
  $region6: #{modulated_att_forward.1} parent=0 // pred_check
    _
  $region7: #{modulated_att_forward.1} parent=0 // pred_check_branch
    %15 = sbr.rel (0) target = $region9
  $region8: #{modulated_att_forward.1} parent=0 // pred_region
    _
  $region9: #{modulated_att_forward.1} parent=0 // pred_fallthru
    _
  // Predicated region
  $region10: #{modulated_att_forward.1} parent=0 // pred_check
    _
  $region11: #{modulated_att_forward.1} parent=0 // pred_check_branch
    %17 = sbr.rel (0) target = $region13
  $region12: #{modulated_att_forward.1} parent=0 // pred_region
    _
  $region13: #{modulated_att_forward.1} parent=0 // pred_fallthru
    _
  // Predicated region
  $region14: #{modulated_att_forward.1} parent=0 // pred_check
    _
  $region15: #{modulated_att_forward.1} parent=0 // pred_check_branch
    %19 = sbr.rel (0) target = $region17
  $region16: #{modulated_att_forward.1} parent=0 // pred_region
    _
  $region17: #{modulated_att_forward.1} parent=0 // pred_fallthru
    _
  // Predicated region
  $region18: #{modulated_att_forward.1} parent=0 // pred_check
    _
  $region19: #{modulated_att_forward.1} parent=0 // pred_check_branch
    %21 = sbr.rel (0) target = $region21
  $region20: #{modulated_att_forward.1} parent=0 // pred_region
    _
  $region21: #{modulated_att_forward.1} parent=0 // pred_fallthru
    _
  %v22 = vld [vmem:[%s0] sm:$0xff]
  %v23 = vld [vmem:[%s0 + $0x8] sm:$0xff]
  %v24 = vld [vmem:[%s0 + $0x10] sm:$0xff]
  %v25 = vld [vmem:[%s0 + $0x18] sm:$0xff]
  %v26 = vld [vmem:[%s0 + $0x20] sm:$0xff]
  %v27 = vld [vmem:[%s0 + $0x28] sm:$0xff]
  %v28 = vld [vmem:[%s0 + $0x30] sm:$0xff]
  %v29 = vld [vmem:[%s0 + $0x38] sm:$0xff]
  %v30 = vld [vmem:[%s0 + $0x40] sm:$0xff]
  %v31 = vld [vmem:[%s0 + $0x48] sm:$0xff]
  %v32 = vld [vmem:[%s0 + $0x50] sm:$0xff]
  %v33 = vld [vmem:[%s0 + $0x58] sm:$0xff]
  %v34 = vld [vmem:[%s0 + $0x60] sm:$0xff]
  %v35 = vld [vmem:[%s0 + $0x68] sm:$0xff]
  %v36 = vld [vmem:[%s2] sm:$0xff]
  %v37 = vld [vmem:[%s2 + $0x8] sm:$0xff]
  %v38 = vld [vmem:[%s3] sm:$0x1]
  %v40 = vlaneseq
  %v41 = vshrl.u32 %v40, 7
  %v42 = vsub.s32 0, %v41
  %v43 = vrot.slane %v38, %v42
  %vm45 = vcmask 130048
  %v47 = vsel %vm45, %v22, 0
  %v50 = vsel %vm45, %v23, 0
  %v53 = vsel %vm45, %v24, 0
  %v56 = vsel %vm45, %v25, 0
  %v59 = vsel %vm45, %v26, 0
  %v62 = vsel %vm45, %v27, 0
  %v65 = vsel %vm45, %v28, 0
  %v68 = vsel %vm45, %v29, 0
  %v71 = vsel %vm45, %v30, 0
  %v74 = vsel %vm45, %v31, 0
  %v77 = vsel %vm45, %v32, 0
  %v80 = vsel %vm45, %v33, 0
  %v83 = vsel %vm45, %v34, 0
  %v86 = vsel %vm45, %v35, 0
  %88 = vmatprep.subr.mxu0 0.0
  %89 = vmatpush1.msra.mxu0 0.0
  %90 = vmatprep.subr.mxu0 0.0
  %91 = vmatpush1.msra.mxu0 0.0
  %92 = vmatprep.subr.mxu0 0.0
  %93 = vmatpush1.msra.mxu0 0.0
  %94 = vmatprep.subr.mxu0 0.0
  %95 = vmatpush1.msra.mxu0 0.0
  %96 = vmatprep.subr.mxu0 0.0
  %97 = vmatpush1.msra.mxu0 0.0
  %98 = vmatprep.subr.mxu0 0.0
  %99 = vmatpush1.msra.mxu0 0.0
  %100 = vmatprep.subr.mxu0 0.0
  %101 = vmatpush1.msra.mxu0 0.0
  %102 = vmatprep.subr.mxu0 0.0
  %103 = vmatpush1.msra.mxu0 0.0
  %104 = vmatprep.subr.mxu0 0.0
  %105 = vmatpush1.msra.mxu0 0.0
  %106 = vmatprep.subr.mxu0 0.0
  %107 = vmatpush1.msra.mxu0 0.0
  %108 = vmatprep.subr.mxu0 0.0
  %109 = vmatpush1.msra.mxu0 0.0
  %110 = vmatprep.subr.mxu0 0.0
  %111 = vmatpush1.msra.mxu0 0.0
  %112 = vmatprep.subr.mxu0 0.0
  %113 = vmatpush1.msra.mxu0 0.0
  %114 = vmatprep.subr.mxu0 0.0
  %115 = vmatpush1.msra.mxu0 0.0
  %116 = vmatprep.subr.mxu0 0.0
  %117 = vmatpush1.msra.mxu0 %v37
  %118 = vmatprep.subr.mxu0 0.0
  %119 = vmatpush1.msra.mxu0 %v36
  %120 = vmatprep.subr.mxu0 0.0
  %121 = vmatpush2.msra.mxu0 0.0
  %122 = vmatprep.subr.mxu0 0.0
  %123 = vmatpush2.msra.mxu0 0.0
  %124 = vmatprep.subr.mxu0 0.0
  %125 = vmatpush2.msra.mxu0 0.0
  %126 = vmatprep.subr.mxu0 0.0
  %127 = vmatpush2.msra.mxu0 0.0
  %128 = vmatprep.subr.mxu0 0.0
  %129 = vmatpush2.msra.mxu0 0.0
  %130 = vmatprep.subr.mxu0 0.0
  %131 = vmatpush2.msra.mxu0 0.0
  %132 = vmatprep.subr.mxu0 0.0
  %133 = vmatpush2.msra.mxu0 0.0
  %134 = vmatprep.subr.mxu0 0.0
  %135 = vmatpush2.msra.mxu0 0.0
  %136 = vmatprep.subr.mxu0 0.0
  %137 = vmatpush2.msra.mxu0 0.0
  %138 = vmatprep.subr.mxu0 0.0
  %139 = vmatpush2.msra.mxu0 0.0
  %140 = vmatprep.subr.mxu0 0.0
  %141 = vmatpush2.msra.mxu0 0.0
  %142 = vmatprep.subr.mxu0 0.0
  %143 = vmatpush2.msra.mxu0 0.0
  %144 = vmatprep.subr.mxu0 0.0
  %145 = vmatpush2.msra.mxu0 0.0
  %146 = vmatprep.subr.mxu0 0.0
  %147 = vmatpush2.msra.mxu0 0.0
  %148 = vmatprep.subr.mxu0 0.0
  %149 = vmatpush2.msra.mxu0 0.0
  %150 = vmatprep.subr.mxu0 0.0
  %151 = vmatpush2.msra.mxu0 0.0
  %152 = vmatprep.mubr.f32.mxu0 0.0
  %153 = vmatmul.mubr.f32.gmra.mxu0 %v47
  %v154 = vpop.f32.mrf.mxu0
  %v155 = vadd.f32 %v43, %v154
  %v156 = vpop.f32.mrf.mxu0
  %157 = vmatprep.mubr.f32.mxu0 0.0
  %158 = vmatmul.mubr.f32.gmra.mxu0 %v50
  %v159 = vpop.f32.mrf.mxu0
  %v160 = vadd.f32 %v43, %v159
  %v161 = vpop.f32.mrf.mxu0
  %162 = vmatprep.mubr.f32.mxu0 0.0
  %163 = vmatmul.mubr.f32.gmra.mxu0 %v53
  %v164 = vpop.f32.mrf.mxu0
  %v165 = vadd.f32 %v43, %v164
  %v166 = vpop.f32.mrf.mxu0
  %167 = vmatprep.mubr.f32.mxu0 0.0
  %168 = vmatmul.mubr.f32.gmra.mxu0 %v56
  %v169 = vpop.f32.mrf.mxu0
  %v170 = vadd.f32 %v43, %v169
  %v171 = vpop.f32.mrf.mxu0
  %172 = vmatprep.mubr.f32.mxu0 0.0
  %173 = vmatmul.mubr.f32.gmra.mxu0 %v59
  %v174 = vpop.f32.mrf.mxu0
  %v175 = vadd.f32 %v43, %v174
  %v176 = vpop.f32.mrf.mxu0
  %177 = vmatprep.mubr.f32.mxu0 0.0
  %178 = vmatmul.mubr.f32.gmra.mxu0 %v62
  %v179 = vpop.f32.mrf.mxu0
  %v180 = vadd.f32 %v43, %v179
  %v181 = vpop.f32.mrf.mxu0
  %182 = vmatprep.mubr.f32.mxu0 0.0
  %183 = vmatmul.mubr.f32.gmra.mxu0 %v65
  %v184 = vpop.f32.mrf.mxu0
  %v185 = vadd.f32 %v43, %v184
  %v186 = vpop.f32.mrf.mxu0
  %187 = vmatprep.mubr.f32.mxu0 0.0
  %188 = vmatmul.mubr.f32.gmra.mxu0 %v68
  %v189 = vpop.f32.mrf.mxu0
  %v190 = vadd.f32 %v43, %v189
  %v191 = vpop.f32.mrf.mxu0
  %192 = vmatprep.mubr.f32.mxu0 0.0
  %193 = vmatmul.mubr.f32.gmra.mxu0 %v71
  %v194 = vpop.f32.mrf.mxu0
  %v195 = vadd.f32 %v43, %v194
  %v196 = vpop.f32.mrf.mxu0
  %197 = vmatprep.mubr.f32.mxu0 0.0
  %198 = vmatmul.mubr.f32.gmra.mxu0 %v74
  %v199 = vpop.f32.mrf.mxu0
  %v200 = vadd.f32 %v43, %v199
  %v201 = vpop.f32.mrf.mxu0
  %202 = vmatprep.mubr.f32.mxu0 0.0
  %203 = vmatmul.mubr.f32.gmra.mxu0 %v77
  %v204 = vpop.f32.mrf.mxu0
  %v205 = vadd.f32 %v43, %v204
  %v206 = vpop.f32.mrf.mxu0
  %207 = vmatprep.mubr.f32.mxu0 0.0
  %208 = vmatmul.mubr.f32.gmra.mxu0 %v80
  %v209 = vpop.f32.mrf.mxu0
  %v210 = vadd.f32 %v43, %v209
  %v211 = vpop.f32.mrf.mxu0
  %212 = vmatprep.mubr.f32.mxu0 0.0
  %213 = vmatmul.mubr.f32.gmra.mxu0 %v83
  %v214 = vpop.f32.mrf.mxu0
  %v215 = vadd.f32 %v43, %v214
  %v216 = vpop.f32.mrf.mxu0
  %217 = vmatprep.mubr.f32.mxu0 0.0
  %218 = vmatmul.mubr.f32.gmra.mxu0 %v86
  %v219 = vpop.f32.mrf.mxu0
  %v220 = vadd.f32 %v43, %v219
  %v221 = vpop.f32.mrf.mxu0
  %222 = vdwg.mxu0
  %230 = vrot.lane.b32.xlu0 %v155, 120
  %v231 = vpop.permute.xlu0 %230
  %232 = vrot.lane.b32.xlu0 %v160, 120
  %v233 = vpop.permute.xlu0 %232
  %234 = vrot.lane.b32.xlu0 %v165, 120
  %v235 = vpop.permute.xlu0 %234
  %236 = vrot.lane.b32.xlu0 %v170, 120
  %v237 = vpop.permute.xlu0 %236
  %238 = vrot.lane.b32.xlu0 %v175, 120
  %v239 = vpop.permute.xlu0 %238
  %240 = vrot.lane.b32.xlu0 %v180, 120
  %v241 = vpop.permute.xlu0 %240
  %242 = vrot.lane.b32.xlu0 %v185, 120
  %v243 = vpop.permute.xlu0 %242
  %244 = vrot.lane.b32.xlu0 %v155, 112
  %v245 = vpop.permute.xlu0 %244
  %246 = vrot.lane.b32.xlu0 %v160, 112
  %v247 = vpop.permute.xlu0 %246
  %248 = vrot.lane.b32.xlu0 %v165, 112
  %v249 = vpop.permute.xlu0 %248
  %250 = vrot.lane.b32.xlu0 %v170, 112
  %v251 = vpop.permute.xlu0 %250
  %252 = vrot.lane.b32.xlu0 %v175, 112
  %v253 = vpop.permute.xlu0 %252
  %254 = vrot.lane.b32.xlu0 %v180, 112
  %v255 = vpop.permute.xlu0 %254
  %256 = vrot.lane.b32.xlu0 %v185, 112
  %v257 = vpop.permute.xlu0 %256
  %vm258 = vcmask 64512
  %v259 = vsel %vm258, %v231, 0
  %v261 = vsel %vm258, %v233, 0
  %v263 = vsel %vm258, %v235, 0
  %v265 = vsel %vm258, %v237, 0
  %v267 = vsel %vm258, %v239, 0
  %v269 = vsel %vm258, %v241, 0
  %v271 = vsel %vm258, %v243, 0
  %v273 = vsel %vm258, %v245, 0
  %v275 = vsel %vm258, %v247, 0
  %v277 = vsel %vm258, %v249, 0
  %v279 = vsel %vm258, %v251, 0
  %v281 = vsel %vm258, %v253, 0
  %v283 = vsel %vm258, %v255, 0
  %v285 = vsel %vm258, %v257, 0
  %287 = vmatprep.subr.mxu0 0.0
  %288 = vmatpush1.xpose.msra.mxu0 0.0
  %289 = vmatprep.subr.mxu0 0.0
  %290 = vmatpush1.xpose.msra.mxu0 0.0
  %291 = vmatprep.subr.mxu0 0.0
  %292 = vmatpush1.xpose.msra.mxu0 0.0
  %293 = vmatprep.subr.mxu0 0.0
  %294 = vmatpush1.xpose.msra.mxu0 0.0
  %295 = vmatprep.subr.mxu0 0.0
  %296 = vmatpush1.xpose.msra.mxu0 0.0
  %297 = vmatprep.subr.mxu0 0.0
  %298 = vmatpush1.xpose.msra.mxu0 0.0
  %299 = vmatprep.subr.mxu0 0.0
  %300 = vmatpush1.xpose.msra.mxu0 0.0
  %301 = vmatprep.subr.mxu0 0.0
  %302 = vmatpush1.xpose.msra.mxu0 0.0
  %303 = vmatprep.subr.mxu0 0.0
  %304 = vmatpush1.xpose.msra.mxu0 0.0
  %305 = vmatprep.subr.mxu0 0.0
  %306 = vmatpush1.xpose.msra.mxu0 %v285
  %307 = vmatprep.subr.mxu0 0.0
  %308 = vmatpush1.xpose.msra.mxu0 %v283
  %309 = vmatprep.subr.mxu0 0.0
  %310 = vmatpush1.xpose.msra.mxu0 %v281
  %311 = vmatprep.subr.mxu0 0.0
  %312 = vmatpush1.xpose.msra.mxu0 %v279
  %313 = vmatprep.subr.mxu0 0.0
  %314 = vmatpush1.xpose.msra.mxu0 %v277
  %315 = vmatprep.subr.mxu0 0.0
  %316 = vmatpush1.xpose.msra.mxu0 %v275
  %317 = vmatprep.subr.mxu0 0.0
  %318 = vmatpush1.xpose.msra.mxu0 %v273
  %319 = vmatprep.subr.mxu0 0.0
  %320 = vmatpush2.xpose.msra.mxu0 0.0
  %321 = vmatprep.subr.mxu0 0.0
  %322 = vmatpush2.xpose.msra.mxu0 0.0
  %323 = vmatprep.subr.mxu0 0.0
  %324 = vmatpush2.xpose.msra.mxu0 0.0
  %325 = vmatprep.subr.mxu0 0.0
  %326 = vmatpush2.xpose.msra.mxu0 0.0
  %327 = vmatprep.subr.mxu0 0.0
  %328 = vmatpush2.xpose.msra.mxu0 0.0
  %329 = vmatprep.subr.mxu0 0.0
  %330 = vmatpush2.xpose.msra.mxu0 0.0
  %331 = vmatprep.subr.mxu0 0.0
  %332 = vmatpush2.xpose.msra.mxu0 0.0
  %333 = vmatprep.subr.mxu0 0.0
  %334 = vmatpush2.xpose.msra.mxu0 0.0
  %335 = vmatprep.subr.mxu0 0.0
  %336 = vmatpush2.xpose.msra.mxu0 0.0
  %337 = vmatprep.subr.mxu0 0.0
  %338 = vmatpush2.xpose.msra.mxu0 0.0
  %339 = vmatprep.subr.mxu0 0.0
  %340 = vmatpush2.xpose.msra.mxu0 0.0
  %341 = vmatprep.subr.mxu0 0.0
  %342 = vmatpush2.xpose.msra.mxu0 0.0
  %343 = vmatprep.subr.mxu0 0.0
  %344 = vmatpush2.xpose.msra.mxu0 0.0
  %345 = vmatprep.subr.mxu0 0.0
  %346 = vmatpush2.xpose.msra.mxu0 0.0
  %347 = vmatprep.subr.mxu0 0.0
  %348 = vmatpush2.xpose.msra.mxu0 0.0
  %349 = vmatprep.subr.mxu0 0.0
  %350 = vmatpush2.xpose.msra.mxu0 0.0
  %351 = vmatprep.mubr.f32.mxu0 0.0
  %352 = vmatmul.mubr.f32.gmra.mxu0 %v259
  %v353 = vpop.f32.mrf.mxu0
  %v354 = vadd.f32 0.0, %v353
  %v355 = vpop.f32.mrf.mxu0
  %356 = vmatprep.mubr.f32.mxu0 0.0
  %357 = vmatmul.mubr.f32.gmra.mxu0 %v261
  %v358 = vpop.f32.mrf.mxu0
  %v359 = vadd.f32 0.0, %v358
  %v360 = vpop.f32.mrf.mxu0
  %361 = vmatprep.mubr.f32.mxu0 0.0
  %362 = vmatmul.mubr.f32.gmra.mxu0 %v263
  %v363 = vpop.f32.mrf.mxu0
  %v364 = vadd.f32 0.0, %v363
  %v365 = vpop.f32.mrf.mxu0
  %366 = vmatprep.mubr.f32.mxu0 0.0
  %367 = vmatmul.mubr.f32.gmra.mxu0 %v265
  %v368 = vpop.f32.mrf.mxu0
  %v369 = vadd.f32 0.0, %v368
  %v370 = vpop.f32.mrf.mxu0
  %371 = vmatprep.mubr.f32.mxu0 0.0
  %372 = vmatmul.mubr.f32.gmra.mxu0 %v267
  %v373 = vpop.f32.mrf.mxu0
  %v374 = vadd.f32 0.0, %v373
  %v375 = vpop.f32.mrf.mxu0
  %376 = vmatprep.mubr.f32.mxu0 0.0
  %377 = vmatmul.mubr.f32.gmra.mxu0 %v269
  %v378 = vpop.f32.mrf.mxu0
  %v379 = vadd.f32 0.0, %v378
  %v380 = vpop.f32.mrf.mxu0
  %381 = vmatprep.mubr.f32.mxu0 0.0
  %382 = vmatmul.mubr.f32.gmra.mxu0 %v271
  %v383 = vpop.f32.mrf.mxu0
  %v384 = vadd.f32 0.0, %v383
  %v385 = vpop.f32.mrf.mxu0
  %386 = vdwg.mxu0
  %394 = vrot.lane.b32.xlu0 %v190, 120
  %v395 = vpop.permute.xlu0 %394
  %396 = vrot.lane.b32.xlu0 %v195, 120
  %v397 = vpop.permute.xlu0 %396
  %398 = vrot.lane.b32.xlu0 %v200, 120
  %v399 = vpop.permute.xlu0 %398
  %400 = vrot.lane.b32.xlu0 %v205, 120
  %v401 = vpop.permute.xlu0 %400
  %402 = vrot.lane.b32.xlu0 %v210, 120
  %v403 = vpop.permute.xlu0 %402
  %404 = vrot.lane.b32.xlu0 %v215, 120
  %v405 = vpop.permute.xlu0 %404
  %406 = vrot.lane.b32.xlu0 %v220, 120
  %v407 = vpop.permute.xlu0 %406
  %408 = vrot.lane.b32.xlu0 %v190, 112
  %v409 = vpop.permute.xlu0 %408
  %410 = vrot.lane.b32.xlu0 %v195, 112
  %v411 = vpop.permute.xlu0 %410
  %412 = vrot.lane.b32.xlu0 %v200, 112
  %v413 = vpop.permute.xlu0 %412
  %414 = vrot.lane.b32.xlu0 %v205, 112
  %v415 = vpop.permute.xlu0 %414
  %416 = vrot.lane.b32.xlu0 %v210, 112
  %v417 = vpop.permute.xlu0 %416
  %418 = vrot.lane.b32.xlu0 %v215, 112
  %v419 = vpop.permute.xlu0 %418
  %420 = vrot.lane.b32.xlu0 %v220, 112
  %v421 = vpop.permute.xlu0 %420
  %v422 = vsel %vm258, %v395, 0
  %v424 = vsel %vm258, %v397, 0
  %v426 = vsel %vm258, %v399, 0
  %v428 = vsel %vm258, %v401, 0
  %v430 = vsel %vm258, %v403, 0
  %v432 = vsel %vm258, %v405, 0
  %v434 = vsel %vm258, %v407, 0
  %v436 = vsel %vm258, %v409, 0
  %v438 = vsel %vm258, %v411, 0
  %v440 = vsel %vm258, %v413, 0
  %v442 = vsel %vm258, %v415, 0
  %v444 = vsel %vm258, %v417, 0
  %v446 = vsel %vm258, %v419, 0
  %v448 = vsel %vm258, %v421, 0
  %450 = vmatprep.subr.mxu0 0.0
  %451 = vmatpush1.xpose.msra.mxu0 0.0
  %452 = vmatprep.subr.mxu0 0.0
  %453 = vmatpush1.xpose.msra.mxu0 0.0
  %454 = vmatprep.subr.mxu0 0.0
  %455 = vmatpush1.xpose.msra.mxu0 0.0
  %456 = vmatprep.subr.mxu0 0.0
  %457 = vmatpush1.xpose.msra.mxu0 0.0
  %458 = vmatprep.subr.mxu0 0.0
  %459 = vmatpush1.xpose.msra.mxu0 0.0
  %460 = vmatprep.subr.mxu0 0.0
  %461 = vmatpush1.xpose.msra.mxu0 0.0
  %462 = vmatprep.subr.mxu0 0.0
  %463 = vmatpush1.xpose.msra.mxu0 0.0
  %464 = vmatprep.subr.mxu0 0.0
  %465 = vmatpush1.xpose.msra.mxu0 0.0
  %466 = vmatprep.subr.mxu0 0.0
  %467 = vmatpush1.xpose.msra.mxu0 0.0
  %468 = vmatprep.subr.mxu0 0.0
  %469 = vmatpush1.xpose.msra.mxu0 %v448
  %470 = vmatprep.subr.mxu0 0.0
  %471 = vmatpush1.xpose.msra.mxu0 %v446
  %472 = vmatprep.subr.mxu0 0.0
  %473 = vmatpush1.xpose.msra.mxu0 %v444
  %474 = vmatprep.subr.mxu0 0.0
  %475 = vmatpush1.xpose.msra.mxu0 %v442
  %476 = vmatprep.subr.mxu0 0.0
  %477 = vmatpush1.xpose.msra.mxu0 %v440
  %478 = vmatprep.subr.mxu0 0.0
  %479 = vmatpush1.xpose.msra.mxu0 %v438
  %480 = vmatprep.subr.mxu0 0.0
  %481 = vmatpush1.xpose.msra.mxu0 %v436
  %482 = vmatprep.subr.mxu0 0.0
  %483 = vmatpush2.xpose.msra.mxu0 0.0
  %484 = vmatprep.subr.mxu0 0.0
  %485 = vmatpush2.xpose.msra.mxu0 0.0
  %486 = vmatprep.subr.mxu0 0.0
  %487 = vmatpush2.xpose.msra.mxu0 0.0
  %488 = vmatprep.subr.mxu0 0.0
  %489 = vmatpush2.xpose.msra.mxu0 0.0
  %490 = vmatprep.subr.mxu0 0.0
  %491 = vmatpush2.xpose.msra.mxu0 0.0
  %492 = vmatprep.subr.mxu0 0.0
  %493 = vmatpush2.xpose.msra.mxu0 0.0
  %494 = vmatprep.subr.mxu0 0.0
  %495 = vmatpush2.xpose.msra.mxu0 0.0
  %496 = vmatprep.subr.mxu0 0.0
  %497 = vmatpush2.xpose.msra.mxu0 0.0
  %498 = vmatprep.subr.mxu0 0.0
  %499 = vmatpush2.xpose.msra.mxu0 0.0
  %500 = vmatprep.subr.mxu0 0.0
  %501 = vmatpush2.xpose.msra.mxu0 0.0
  %502 = vmatprep.subr.mxu0 0.0
  %503 = vmatpush2.xpose.msra.mxu0 0.0
  %504 = vmatprep.subr.mxu0 0.0
  %505 = vmatpush2.xpose.msra.mxu0 0.0
  %506 = vmatprep.subr.mxu0 0.0
  %507 = vmatpush2.xpose.msra.mxu0 0.0
  %508 = vmatprep.subr.mxu0 0.0
  %509 = vmatpush2.xpose.msra.mxu0 0.0
  %510 = vmatprep.subr.mxu0 0.0
  %511 = vmatpush2.xpose.msra.mxu0 0.0
  %512 = vmatprep.subr.mxu0 0.0
  %513 = vmatpush2.xpose.msra.mxu0 0.0
  %514 = vmatprep.mubr.f32.mxu0 0.0
  %515 = vmatmul.mubr.f32.gmra.mxu0 %v422
  %v516 = vpop.f32.mrf.mxu0
  %v517 = vadd.f32 0.0, %v516
  %v518 = vpop.f32.mrf.mxu0
  %519 = vmatprep.mubr.f32.mxu0 0.0
  %520 = vmatmul.mubr.f32.gmra.mxu0 %v424
  %v521 = vpop.f32.mrf.mxu0
  %v522 = vadd.f32 0.0, %v521
  %v523 = vpop.f32.mrf.mxu0
  %524 = vmatprep.mubr.f32.mxu0 0.0
  %525 = vmatmul.mubr.f32.gmra.mxu0 %v426
  %v526 = vpop.f32.mrf.mxu0
  %v527 = vadd.f32 0.0, %v526
  %v528 = vpop.f32.mrf.mxu0
  %529 = vmatprep.mubr.f32.mxu0 0.0
  %530 = vmatmul.mubr.f32.gmra.mxu0 %v428
  %v531 = vpop.f32.mrf.mxu0
  %v532 = vadd.f32 0.0, %v531
  %v533 = vpop.f32.mrf.mxu0
  %534 = vmatprep.mubr.f32.mxu0 0.0
  %535 = vmatmul.mubr.f32.gmra.mxu0 %v430
  %v536 = vpop.f32.mrf.mxu0
  %v537 = vadd.f32 0.0, %v536
  %v538 = vpop.f32.mrf.mxu0
  %539 = vmatprep.mubr.f32.mxu0 0.0
  %540 = vmatmul.mubr.f32.gmra.mxu0 %v432
  %v541 = vpop.f32.mrf.mxu0
  %v542 = vadd.f32 0.0, %v541
  %v543 = vpop.f32.mrf.mxu0
  %544 = vmatprep.mubr.f32.mxu0 0.0
  %545 = vmatmul.mubr.f32.gmra.mxu0 %v434
  %v546 = vpop.f32.mrf.mxu0
  %v547 = vadd.f32 0.0, %v546
  %v548 = vpop.f32.mrf.mxu0
  %549 = vdwg.mxu0
  %v550 = vlaneseq
  %v551 = vand.u32 %v550, 127
  %vm552 = vcmp.lt.s32.totalorder %v551, 49
  %v553 = vsel %vm552, %v354, -1e+30
  %v554 = vsel %vm552, %v359, -1e+30
  %v555 = vsel %vm552, %v364, -1e+30
  %v556 = vsel %vm552, %v369, -1e+30
  %v557 = vsel %vm552, %v374, -1e+30
  %v558 = vsel %vm552, %v379, -1e+30
  %v559 = vsel %vm552, %v384, -1e+30
  %v560 = vsel %vm552, %v517, -1e+30
  %v561 = vsel %vm552, %v522, -1e+30
  %v562 = vsel %vm552, %v527, -1e+30
  %v563 = vsel %vm552, %v532, -1e+30
  %v564 = vsel %vm552, %v537, -1e+30
  %v565 = vsel %vm552, %v542, -1e+30
  %v566 = vsel %vm552, %v547, -1e+30
  %vm567 = vcmask 457728
  %v568 = vsel %vm567, %v553, -inf
  %569 = vmax.xlane.f32.xlu0 %v568
  %v570 = vpop.xlane.xlu0 %569
  %v571 = vsel %vm567, %v554, -inf
  %572 = vmax.xlane.f32.xlu0 %v571
  %v573 = vpop.xlane.xlu0 %572
  %v574 = vsel %vm567, %v555, -inf
  %575 = vmax.xlane.f32.xlu0 %v574
  %v576 = vpop.xlane.xlu0 %575
  %v577 = vsel %vm567, %v556, -inf
  %578 = vmax.xlane.f32.xlu0 %v577
  %v579 = vpop.xlane.xlu0 %578
  %v580 = vsel %vm567, %v557, -inf
  %581 = vmax.xlane.f32.xlu0 %v580
  %v582 = vpop.xlane.xlu0 %581
  %v583 = vsel %vm567, %v558, -inf
  %584 = vmax.xlane.f32.xlu0 %v583
  %v585 = vpop.xlane.xlu0 %584
  %v586 = vsel %vm567, %v559, -inf
  %587 = vmax.xlane.f32.xlu0 %v586
  %v588 = vpop.xlane.xlu0 %587
  %v589 = vsel %vm567, %v560, -inf
  %590 = vmax.xlane.f32.xlu0 %v589
  %v591 = vpop.xlane.xlu0 %590
  %v592 = vsel %vm567, %v561, -inf
  %593 = vmax.xlane.f32.xlu0 %v592
  %v594 = vpop.xlane.xlu0 %593
  %v595 = vsel %vm567, %v562, -inf
  %596 = vmax.xlane.f32.xlu0 %v595
  %v597 = vpop.xlane.xlu0 %596
  %v598 = vsel %vm567, %v563, -inf
  %599 = vmax.xlane.f32.xlu0 %v598
  %v600 = vpop.xlane.xlu0 %599
  %v601 = vsel %vm567, %v564, -inf
  %602 = vmax.xlane.f32.xlu0 %v601
  %v603 = vpop.xlane.xlu0 %602
  %v604 = vsel %vm567, %v565, -inf
  %605 = vmax.xlane.f32.xlu0 %v604
  %v606 = vpop.xlane.xlu0 %605
  %v607 = vsel %vm567, %v566, -inf
  %608 = vmax.xlane.f32.xlu0 %v607
  %v609 = vpop.xlane.xlu0 %608
  %v610 = vsub.f32 %v553, %v570
  %v611 = vsub.f32 %v554, %v573
  %v612 = vsub.f32 %v555, %v576
  %v613 = vsub.f32 %v556, %v579
  %v614 = vsub.f32 %v557, %v582
  %v615 = vsub.f32 %v558, %v585
  %v616 = vsub.f32 %v559, %v588
  %v617 = vsub.f32 %v560, %v591
  %v618 = vsub.f32 %v561, %v594
  %v619 = vsub.f32 %v562, %v597
  %v620 = vsub.f32 %v563, %v600
  %v621 = vsub.f32 %v564, %v603
  %v622 = vsub.f32 %v565, %v606
  %v623 = vsub.f32 %v566, %v609
  %v624 = vmul.f32 %v610, 1.442695
  %v625 = vpow.pop %v624
  %v626 = vmul.f32 %v611, 1.442695
  %v627 = vpow.pop %v626
  %v628 = vmul.f32 %v612, 1.442695
  %v629 = vpow.pop %v628
  %v630 = vmul.f32 %v613, 1.442695
  %v631 = vpow.pop %v630
  %v632 = vmul.f32 %v614, 1.442695
  %v633 = vpow.pop %v632
  %v634 = vmul.f32 %v615, 1.442695
  %v635 = vpow.pop %v634
  %v636 = vmul.f32 %v616, 1.442695
  %v637 = vpow.pop %v636
  %v638 = vmul.f32 %v617, 1.442695
  %v639 = vpow.pop %v638
  %v640 = vmul.f32 %v618, 1.442695
  %v641 = vpow.pop %v640
  %v642 = vmul.f32 %v619, 1.442695
  %v643 = vpow.pop %v642
  %v644 = vmul.f32 %v620, 1.442695
  %v645 = vpow.pop %v644
  %v646 = vmul.f32 %v621, 1.442695
  %v647 = vpow.pop %v646
  %v648 = vmul.f32 %v622, 1.442695
  %v649 = vpow.pop %v648
  %v650 = vmul.f32 %v623, 1.442695
  %v651 = vpow.pop %v650
  %v652 = vsel %vm567, %v625, 0.0
  %653 = vadd.xlane.f32.xlu0 %v652
  %v654 = vpop.xlane.xlu0 %653
  %v655 = vsel %vm567, %v627, 0.0
  %656 = vadd.xlane.f32.xlu0 %v655
  %v657 = vpop.xlane.xlu0 %656
  %v658 = vsel %vm567, %v629, 0.0
  %659 = vadd.xlane.f32.xlu0 %v658
  %v660 = vpop.xlane.xlu0 %659
  %v661 = vsel %vm567, %v631, 0.0
  %662 = vadd.xlane.f32.xlu0 %v661
  %v663 = vpop.xlane.xlu0 %662
  %v664 = vsel %vm567, %v633, 0.0
  %665 = vadd.xlane.f32.xlu0 %v664
  %v666 = vpop.xlane.xlu0 %665
  %v667 = vsel %vm567, %v635, 0.0
  %668 = vadd.xlane.f32.xlu0 %v667
  %v669 = vpop.xlane.xlu0 %668
  %v670 = vsel %vm567, %v637, 0.0
  %671 = vadd.xlane.f32.xlu0 %v670
  %v672 = vpop.xlane.xlu0 %671
  %v673 = vsel %vm567, %v639, 0.0
  %674 = vadd.xlane.f32.xlu0 %v673
  %v675 = vpop.xlane.xlu0 %674
  %v676 = vsel %vm567, %v641, 0.0
  %677 = vadd.xlane.f32.xlu0 %v676
  %v678 = vpop.xlane.xlu0 %677
  %v679 = vsel %vm567, %v643, 0.0
  %680 = vadd.xlane.f32.xlu0 %v679
  %v681 = vpop.xlane.xlu0 %680
  %v682 = vsel %vm567, %v645, 0.0
  %683 = vadd.xlane.f32.xlu0 %v682
  %v684 = vpop.xlane.xlu0 %683
  %v685 = vsel %vm567, %v647, 0.0
  %686 = vadd.xlane.f32.xlu0 %v685
  %v687 = vpop.xlane.xlu0 %686
  %v688 = vsel %vm567, %v649, 0.0
  %689 = vadd.xlane.f32.xlu0 %v688
  %v690 = vpop.xlane.xlu0 %689
  %v691 = vsel %vm567, %v651, 0.0
  %692 = vadd.xlane.f32.xlu0 %v691
  %v693 = vpop.xlane.xlu0 %692
  %v694 = vrcp.pop %v654
  %v695 = vrcp.pop %v657
  %v696 = vrcp.pop %v660
  %v697 = vrcp.pop %v663
  %v698 = vrcp.pop %v666
  %v699 = vrcp.pop %v669
  %v700 = vrcp.pop %v672
  %v701 = vrcp.pop %v675
  %v702 = vrcp.pop %v678
  %v703 = vrcp.pop %v681
  %v704 = vrcp.pop %v684
  %v705 = vrcp.pop %v687
  %v706 = vrcp.pop %v690
  %v707 = vrcp.pop %v693
  %v708 = vmul.f32 %v625, %v694
  %v709 = vmul.f32 %v627, %v695
  %v710 = vmul.f32 %v629, %v696
  %v711 = vmul.f32 %v631, %v697
  %v712 = vmul.f32 %v633, %v698
  %v713 = vmul.f32 %v635, %v699
  %v714 = vmul.f32 %v637, %v700
  %v715 = vmul.f32 %v639, %v701
  %v716 = vmul.f32 %v641, %v702
  %v717 = vmul.f32 %v643, %v703
  %v718 = vmul.f32 %v645, %v704
  %v719 = vmul.f32 %v647, %v705
  %v720 = vmul.f32 %v649, %v706
  %v721 = vmul.f32 %v651, %v707
  %v723 = vsel %vm567, %v708, 0
  %v726 = vsel %vm567, %v709, 0
  %v729 = vsel %vm567, %v710, 0
  %v732 = vsel %vm567, %v711, 0
  %v735 = vsel %vm567, %v712, 0
  %v738 = vsel %vm567, %v713, 0
  %v741 = vsel %vm567, %v714, 0
  %743 = vmatprep.subr.mxu0 0.0
  %744 = vmatpush1.msra.mxu0 0.0
  %745 = vmatprep.subr.mxu0 0.0
  %746 = vmatpush1.msra.mxu0 0.0
  %747 = vmatprep.subr.mxu0 0.0
  %748 = vmatpush1.msra.mxu0 0.0
  %749 = vmatprep.subr.mxu0 0.0
  %750 = vmatpush1.msra.mxu0 0.0
  %751 = vmatprep.subr.mxu0 0.0
  %752 = vmatpush1.msra.mxu0 0.0
  %753 = vmatprep.subr.mxu0 0.0
  %754 = vmatpush1.msra.mxu0 0.0
  %755 = vmatprep.subr.mxu0 0.0
  %756 = vmatpush1.msra.mxu0 0.0
  %757 = vmatprep.subr.mxu0 0.0
  %758 = vmatpush1.msra.mxu0 0.0
  %759 = vmatprep.subr.mxu0 0.0
  %760 = vmatpush1.msra.mxu0 0.0
  %761 = vmatprep.subr.mxu0 0.0
  %762 = vmatpush1.msra.mxu0 %v185
  %763 = vmatprep.subr.mxu0 0.0
  %764 = vmatpush1.msra.mxu0 %v180
  %765 = vmatprep.subr.mxu0 0.0
  %766 = vmatpush1.msra.mxu0 %v175
  %767 = vmatprep.subr.mxu0 0.0
  %768 = vmatpush1.msra.mxu0 %v170
  %769 = vmatprep.subr.mxu0 0.0
  %770 = vmatpush1.msra.mxu0 %v165
  %771 = vmatprep.subr.mxu0 0.0
  %772 = vmatpush1.msra.mxu0 %v160
  %773 = vmatprep.subr.mxu0 0.0
  %774 = vmatpush1.msra.mxu0 %v155
  %775 = vmatprep.subr.mxu0 0.0
  %776 = vmatpush2.msra.mxu0 0.0
  %777 = vmatprep.subr.mxu0 0.0
  %778 = vmatpush2.msra.mxu0 0.0
  %779 = vmatprep.subr.mxu0 0.0
  %780 = vmatpush2.msra.mxu0 0.0
  %781 = vmatprep.subr.mxu0 0.0
  %782 = vmatpush2.msra.mxu0 0.0
  %783 = vmatprep.subr.mxu0 0.0
  %784 = vmatpush2.msra.mxu0 0.0
  %785 = vmatprep.subr.mxu0 0.0
  %786 = vmatpush2.msra.mxu0 0.0
  %787 = vmatprep.subr.mxu0 0.0
  %788 = vmatpush2.msra.mxu0 0.0
  %789 = vmatprep.subr.mxu0 0.0
  %790 = vmatpush2.msra.mxu0 0.0
  %791 = vmatprep.subr.mxu0 0.0
  %792 = vmatpush2.msra.mxu0 0.0
  %793 = vmatprep.subr.mxu0 0.0
  %794 = vmatpush2.msra.mxu0 0.0
  %795 = vmatprep.subr.mxu0 0.0
  %796 = vmatpush2.msra.mxu0 0.0
  %797 = vmatprep.subr.mxu0 0.0
  %798 = vmatpush2.msra.mxu0 0.0
  %799 = vmatprep.subr.mxu0 0.0
  %800 = vmatpush2.msra.mxu0 0.0
  %801 = vmatprep.subr.mxu0 0.0
  %802 = vmatpush2.msra.mxu0 0.0
  %803 = vmatprep.subr.mxu0 0.0
  %804 = vmatpush2.msra.mxu0 0.0
  %805 = vmatprep.subr.mxu0 0.0
  %806 = vmatpush2.msra.mxu0 0.0
  %807 = vmatprep.mubr.f32.mxu0 0.0
  %808 = vmatmul.mubr.f32.gmra.mxu0 %v723
  %v809 = vpop.f32.mrf.mxu0
  %v810 = vadd.f32 0.0, %v809
  %v811 = vpop.f32.mrf.mxu0
  %812 = vmatprep.mubr.f32.mxu0 0.0
  %813 = vmatmul.mubr.f32.gmra.mxu0 %v726
  %v814 = vpop.f32.mrf.mxu0
  %v815 = vadd.f32 0.0, %v814
  %v816 = vpop.f32.mrf.mxu0
  %817 = vmatprep.mubr.f32.mxu0 0.0
  %818 = vmatmul.mubr.f32.gmra.mxu0 %v729
  %v819 = vpop.f32.mrf.mxu0
  %v820 = vadd.f32 0.0, %v819
  %v821 = vpop.f32.mrf.mxu0
  %822 = vmatprep.mubr.f32.mxu0 0.0
  %823 = vmatmul.mubr.f32.gmra.mxu0 %v732
  %v824 = vpop.f32.mrf.mxu0
  %v825 = vadd.f32 0.0, %v824
  %v826 = vpop.f32.mrf.mxu0
  %827 = vmatprep.mubr.f32.mxu0 0.0
  %828 = vmatmul.mubr.f32.gmra.mxu0 %v735
  %v829 = vpop.f32.mrf.mxu0
  %v830 = vadd.f32 0.0, %v829
  %v831 = vpop.f32.mrf.mxu0
  %832 = vmatprep.mubr.f32.mxu0 0.0
  %833 = vmatmul.mubr.f32.gmra.mxu0 %v738
  %v834 = vpop.f32.mrf.mxu0
  %v835 = vadd.f32 0.0, %v834
  %v836 = vpop.f32.mrf.mxu0
  %837 = vmatprep.mubr.f32.mxu0 0.0
  %838 = vmatmul.mubr.f32.gmra.mxu0 %v741
  %v839 = vpop.f32.mrf.mxu0
  %v840 = vadd.f32 0.0, %v839
  %v841 = vpop.f32.mrf.mxu0
  %842 = vdwg.mxu0
  %v844 = vsel %vm567, %v715, 0
  %v847 = vsel %vm567, %v716, 0
  %v850 = vsel %vm567, %v717, 0
  %v853 = vsel %vm567, %v718, 0
  %v856 = vsel %vm567, %v719, 0
  %v859 = vsel %vm567, %v720, 0
  %v862 = vsel %vm567, %v721, 0
  %864 = vmatprep.subr.mxu0 0.0
  %865 = vmatpush1.msra.mxu0 0.0
  %866 = vmatprep.subr.mxu0 0.0
  %867 = vmatpush1.msra.mxu0 0.0
  %868 = vmatprep.subr.mxu0 0.0
  %869 = vmatpush1.msra.mxu0 0.0
  %870 = vmatprep.subr.mxu0 0.0
  %871 = vmatpush1.msra.mxu0 0.0
  %872 = vmatprep.subr.mxu0 0.0
  %873 = vmatpush1.msra.mxu0 0.0
  %874 = vmatprep.subr.mxu0 0.0
  %875 = vmatpush1.msra.mxu0 0.0
  %876 = vmatprep.subr.mxu0 0.0
  %877 = vmatpush1.msra.mxu0 0.0
  %878 = vmatprep.subr.mxu0 0.0
  %879 = vmatpush1.msra.mxu0 0.0
  %880 = vmatprep.subr.mxu0 0.0
  %881 = vmatpush1.msra.mxu0 0.0
  %882 = vmatprep.subr.mxu0 0.0
  %883 = vmatpush1.msra.mxu0 %v220
  %884 = vmatprep.subr.mxu0 0.0
  %885 = vmatpush1.msra.mxu0 %v215
  %886 = vmatprep.subr.mxu0 0.0
  %887 = vmatpush1.msra.mxu0 %v210
  %888 = vmatprep.subr.mxu0 0.0
  %889 = vmatpush1.msra.mxu0 %v205
  %890 = vmatprep.subr.mxu0 0.0
  %891 = vmatpush1.msra.mxu0 %v200
  %892 = vmatprep.subr.mxu0 0.0
  %893 = vmatpush1.msra.mxu0 %v195
  %894 = vmatprep.subr.mxu0 0.0
  %895 = vmatpush1.msra.mxu0 %v190
  %896 = vmatprep.subr.mxu0 0.0
  %897 = vmatpush2.msra.mxu0 0.0
  %898 = vmatprep.subr.mxu0 0.0
  %899 = vmatpush2.msra.mxu0 0.0
  %900 = vmatprep.subr.mxu0 0.0
  %901 = vmatpush2.msra.mxu0 0.0
  %902 = vmatprep.subr.mxu0 0.0
  %903 = vmatpush2.msra.mxu0 0.0
  %904 = vmatprep.subr.mxu0 0.0
  %905 = vmatpush2.msra.mxu0 0.0
  %906 = vmatprep.subr.mxu0 0.0
  %907 = vmatpush2.msra.mxu0 0.0
  %908 = vmatprep.subr.mxu0 0.0
  %909 = vmatpush2.msra.mxu0 0.0
  %910 = vmatprep.subr.mxu0 0.0
  %911 = vmatpush2.msra.mxu0 0.0
  %912 = vmatprep.subr.mxu0 0.0
  %913 = vmatpush2.msra.mxu0 0.0
  %914 = vmatprep.subr.mxu0 0.0
  %915 = vmatpush2.msra.mxu0 0.0
  %916 = vmatprep.subr.mxu0 0.0
  %917 = vmatpush2.msra.mxu0 0.0
  %918 = vmatprep.subr.mxu0 0.0
  %919 = vmatpush2.msra.mxu0 0.0
  %920 = vmatprep.subr.mxu0 0.0
  %921 = vmatpush2.msra.mxu0 0.0
  %922 = vmatprep.subr.mxu0 0.0
  %923 = vmatpush2.msra.mxu0 0.0
  %924 = vmatprep.subr.mxu0 0.0
  %925 = vmatpush2.msra.mxu0 0.0
  %926 = vmatprep.subr.mxu0 0.0
  %927 = vmatpush2.msra.mxu0 0.0
  %928 = vmatprep.mubr.f32.mxu0 0.0
  %929 = vmatmul.mubr.f32.gmra.mxu0 %v844
  %v930 = vpop.f32.mrf.mxu0
  %v931 = vadd.f32 0.0, %v930
  %v932 = vpop.f32.mrf.mxu0
  %933 = vmatprep.mubr.f32.mxu0 0.0
  %934 = vmatmul.mubr.f32.gmra.mxu0 %v847
  %v935 = vpop.f32.mrf.mxu0
  %v936 = vadd.f32 0.0, %v935
  %v937 = vpop.f32.mrf.mxu0
  %938 = vmatprep.mubr.f32.mxu0 0.0
  %939 = vmatmul.mubr.f32.gmra.mxu0 %v850
  %v940 = vpop.f32.mrf.mxu0
  %v941 = vadd.f32 0.0, %v940
  %v942 = vpop.f32.mrf.mxu0
  %943 = vmatprep.mubr.f32.mxu0 0.0
  %944 = vmatmul.mubr.f32.gmra.mxu0 %v853
  %v945 = vpop.f32.mrf.mxu0
  %v946 = vadd.f32 0.0, %v945
  %v947 = vpop.f32.mrf.mxu0
  %948 = vmatprep.mubr.f32.mxu0 0.0
  %949 = vmatmul.mubr.f32.gmra.mxu0 %v856
  %v950 = vpop.f32.mrf.mxu0
  %v951 = vadd.f32 0.0, %v950
  %v952 = vpop.f32.mrf.mxu0
  %953 = vmatprep.mubr.f32.mxu0 0.0
  %954 = vmatmul.mubr.f32.gmra.mxu0 %v859
  %v955 = vpop.f32.mrf.mxu0
  %v956 = vadd.f32 0.0, %v955
  %v957 = vpop.f32.mrf.mxu0
  %958 = vmatprep.mubr.f32.mxu0 0.0
  %959 = vmatmul.mubr.f32.gmra.mxu0 %v862
  %v960 = vpop.f32.mrf.mxu0
  %v961 = vadd.f32 0.0, %v960
  %v962 = vpop.f32.mrf.mxu0
  %963 = vdwg.mxu0
  %v964 = vld [vmem:[%s4] sm:$0xff]
  %v966 = vsel %vm258, %v810, 0
  %v969 = vsel %vm258, %v815, 0
  %v972 = vsel %vm258, %v820, 0
  %v975 = vsel %vm258, %v825, 0
  %v978 = vsel %vm258, %v830, 0
  %v981 = vsel %vm258, %v835, 0
  %v984 = vsel %vm258, %v840, 0
  %v987 = vsel %vm258, %v931, 0
  %v990 = vsel %vm258, %v936, 0
  %v993 = vsel %vm258, %v941, 0
  %v996 = vsel %vm258, %v946, 0
  %v999 = vsel %vm258, %v951, 0
  %v1002 = vsel %vm258, %v956, 0
  %v1005 = vsel %vm258, %v961, 0
  %1007 = vmatprep.subr.mxu0 0.0
  %1008 = vmatpush1.msra.mxu0 0.0
  %1009 = vmatprep.subr.mxu0 0.0
  %1010 = vmatpush1.msra.mxu0 0.0
  %1011 = vmatprep.subr.mxu0 0.0
  %1012 = vmatpush1.msra.mxu0 0.0
  %1013 = vmatprep.subr.mxu0 0.0
  %1014 = vmatpush1.msra.mxu0 0.0
  %1015 = vmatprep.subr.mxu0 0.0
  %1016 = vmatpush1.msra.mxu0 0.0
  %1017 = vmatprep.subr.mxu0 0.0
  %1018 = vmatpush1.msra.mxu0 0.0
  %1019 = vmatprep.subr.mxu0 0.0
  %1020 = vmatpush1.msra.mxu0 0.0
  %1021 = vmatprep.subr.mxu0 0.0
  %1022 = vmatpush1.msra.mxu0 0.0
  %1023 = vmatprep.subr.mxu0 0.0
  %1024 = vmatpush1.msra.mxu0 0.0
  %1025 = vmatprep.subr.mxu0 0.0
  %1026 = vmatpush1.msra.mxu0 0.0
  %1027 = vmatprep.subr.mxu0 0.0
  %1028 = vmatpush1.msra.mxu0 0.0
  %1029 = vmatprep.subr.mxu0 0.0
  %1030 = vmatpush1.msra.mxu0 0.0
  %1031 = vmatprep.subr.mxu0 0.0
  %1032 = vmatpush1.msra.mxu0 0.0
  %1033 = vmatprep.subr.mxu0 0.0
  %1034 = vmatpush1.msra.mxu0 0.0
  %1035 = vmatprep.subr.mxu0 0.0
  %1036 = vmatpush1.msra.mxu0 0.0
  %1037 = vmatprep.subr.mxu0 0.0
  %1038 = vmatpush1.msra.mxu0 %v964
  %1039 = vmatprep.subr.mxu0 0.0
  %1040 = vmatpush2.msra.mxu0 0.0
  %1041 = vmatprep.subr.mxu0 0.0
  %1042 = vmatpush2.msra.mxu0 0.0
  %1043 = vmatprep.subr.mxu0 0.0
  %1044 = vmatpush2.msra.mxu0 0.0
  %1045 = vmatprep.subr.mxu0 0.0
  %1046 = vmatpush2.msra.mxu0 0.0
  %1047 = vmatprep.subr.mxu0 0.0
  %1048 = vmatpush2.msra.mxu0 0.0
  %1049 = vmatprep.subr.mxu0 0.0
  %1050 = vmatpush2.msra.mxu0 0.0
  %1051 = vmatprep.subr.mxu0 0.0
  %1052 = vmatpush2.msra.mxu0 0.0
  %1053 = vmatprep.subr.mxu0 0.0
  %1054 = vmatpush2.msra.mxu0 0.0
  %1055 = vmatprep.subr.mxu0 0.0
  %1056 = vmatpush2.msra.mxu0 0.0
  %1057 = vmatprep.subr.mxu0 0.0
  %1058 = vmatpush2.msra.mxu0 0.0
  %1059 = vmatprep.subr.mxu0 0.0
  %1060 = vmatpush2.msra.mxu0 0.0
  %1061 = vmatprep.subr.mxu0 0.0
  %1062 = vmatpush2.msra.mxu0 0.0
  %1063 = vmatprep.subr.mxu0 0.0
  %1064 = vmatpush2.msra.mxu0 0.0
  %1065 = vmatprep.subr.mxu0 0.0
  %1066 = vmatpush2.msra.mxu0 0.0
  %1067 = vmatprep.subr.mxu0 0.0
  %1068 = vmatpush2.msra.mxu0 0.0
  %1069 = vmatprep.subr.mxu0 0.0
  %1070 = vmatpush2.msra.mxu0 0.0
  %1071 = vmatprep.mubr.f32.mxu0 0.0
  %1072 = vmatmul.mubr.f32.gmra.mxu0 %v966
  %v1073 = vpop.f32.mrf.mxu0
  %v1074 = vadd.f32 0.0, %v1073
  %v1075 = vpop.f32.mrf.mxu0
  %1076 = vmatprep.mubr.f32.mxu0 0.0
  %1077 = vmatmul.mubr.f32.gmra.mxu0 %v969
  %v1078 = vpop.f32.mrf.mxu0
  %v1079 = vadd.f32 0.0, %v1078
  %v1080 = vpop.f32.mrf.mxu0
  %1081 = vmatprep.mubr.f32.mxu0 0.0
  %1082 = vmatmul.mubr.f32.gmra.mxu0 %v972
  %v1083 = vpop.f32.mrf.mxu0
  %v1084 = vadd.f32 0.0, %v1083
  %v1085 = vpop.f32.mrf.mxu0
  %1086 = vmatprep.mubr.f32.mxu0 0.0
  %1087 = vmatmul.mubr.f32.gmra.mxu0 %v975
  %v1088 = vpop.f32.mrf.mxu0
  %v1089 = vadd.f32 0.0, %v1088
  %v1090 = vpop.f32.mrf.mxu0
  %1091 = vmatprep.mubr.f32.mxu0 0.0
  %1092 = vmatmul.mubr.f32.gmra.mxu0 %v978
  %v1093 = vpop.f32.mrf.mxu0
  %v1094 = vadd.f32 0.0, %v1093
  %v1095 = vpop.f32.mrf.mxu0
  %1096 = vmatprep.mubr.f32.mxu0 0.0
  %1097 = vmatmul.mubr.f32.gmra.mxu0 %v981
  %v1098 = vpop.f32.mrf.mxu0
  %v1099 = vadd.f32 0.0, %v1098
  %v1100 = vpop.f32.mrf.mxu0
  %1101 = vmatprep.mubr.f32.mxu0 0.0
  %1102 = vmatmul.mubr.f32.gmra.mxu0 %v984
  %v1103 = vpop.f32.mrf.mxu0
  %v1104 = vadd.f32 0.0, %v1103
  %v1105 = vpop.f32.mrf.mxu0
  %1106 = vmatprep.mubr.f32.mxu0 0.0
  %1107 = vmatmul.mubr.f32.gmra.mxu0 %v987
  %v1108 = vpop.f32.mrf.mxu0
  %v1109 = vadd.f32 0.0, %v1108
  %v1110 = vpop.f32.mrf.mxu0
  %1111 = vmatprep.mubr.f32.mxu0 0.0
  %1112 = vmatmul.mubr.f32.gmra.mxu0 %v990
  %v1113 = vpop.f32.mrf.mxu0
  %v1114 = vadd.f32 0.0, %v1113
  %v1115 = vpop.f32.mrf.mxu0
  %1116 = vmatprep.mubr.f32.mxu0 0.0
  %1117 = vmatmul.mubr.f32.gmra.mxu0 %v993
  %v1118 = vpop.f32.mrf.mxu0
  %v1119 = vadd.f32 0.0, %v1118
  %v1120 = vpop.f32.mrf.mxu0
  %1121 = vmatprep.mubr.f32.mxu0 0.0
  %1122 = vmatmul.mubr.f32.gmra.mxu0 %v996
  %v1123 = vpop.f32.mrf.mxu0
  %v1124 = vadd.f32 0.0, %v1123
  %v1125 = vpop.f32.mrf.mxu0
  %1126 = vmatprep.mubr.f32.mxu0 0.0
  %1127 = vmatmul.mubr.f32.gmra.mxu0 %v999
  %v1128 = vpop.f32.mrf.mxu0
  %v1129 = vadd.f32 0.0, %v1128
  %v1130 = vpop.f32.mrf.mxu0
  %1131 = vmatprep.mubr.f32.mxu0 0.0
  %1132 = vmatmul.mubr.f32.gmra.mxu0 %v1002
  %v1133 = vpop.f32.mrf.mxu0
  %v1134 = vadd.f32 0.0, %v1133
  %v1135 = vpop.f32.mrf.mxu0
  %1136 = vmatprep.mubr.f32.mxu0 0.0
  %1137 = vmatmul.mubr.f32.gmra.mxu0 %v1005
  %v1138 = vpop.f32.mrf.mxu0
  %v1139 = vadd.f32 0.0, %v1138
  %v1140 = vpop.f32.mrf.mxu0
  %1141 = vdwg.mxu0
  %v1142 = vld [vmem:[%s1] sm:$0xff]
  %v1143 = vld [vmem:[%s1 + $0x8] sm:$0xff]
  %v1144 = vld [vmem:[%s1 + $0x10] sm:$0xff]
  %v1145 = vld [vmem:[%s1 + $0x18] sm:$0xff]
  %v1146 = vld [vmem:[%s1 + $0x20] sm:$0xff]
  %v1147 = vld [vmem:[%s1 + $0x28] sm:$0xff]
  %v1148 = vld [vmem:[%s1 + $0x30] sm:$0xff]
  %v1149 = vld [vmem:[%s1 + $0x38] sm:$0xff]
  %v1150 = vld [vmem:[%s1 + $0x40] sm:$0xff]
  %v1151 = vld [vmem:[%s1 + $0x48] sm:$0xff]
  %v1152 = vld [vmem:[%s1 + $0x50] sm:$0xff]
  %v1153 = vld [vmem:[%s1 + $0x58] sm:$0xff]
  %v1154 = vld [vmem:[%s1 + $0x60] sm:$0xff]
  %v1155 = vld [vmem:[%s1 + $0x68] sm:$0xff]
  %1157 = vset.pattern.permute.xlu0 0
  %1158 = vperm.xlu0 %1157, %v1142
  %v1159 = vpop.permute.xlu0 %1158
  %1162 = vset.pattern.permute.xlu0 0
  %1163 = vperm.xlu0 %1162, %v1143
  %v1164 = vpop.permute.xlu0 %1163
  %1167 = vset.pattern.permute.xlu0 0
  %1168 = vperm.xlu0 %1167, %v1144
  %v1169 = vpop.permute.xlu0 %1168
  %1172 = vset.pattern.permute.xlu0 0
  %1173 = vperm.xlu0 %1172, %v1145
  %v1174 = vpop.permute.xlu0 %1173
  %1177 = vset.pattern.permute.xlu0 0
  %1178 = vperm.xlu0 %1177, %v1146
  %v1179 = vpop.permute.xlu0 %1178
  %1182 = vset.pattern.permute.xlu0 0
  %1183 = vperm.xlu0 %1182, %v1147
  %v1184 = vpop.permute.xlu0 %1183
  %1187 = vset.pattern.permute.xlu0 0
  %1188 = vperm.xlu0 %1187, %v1148
  %v1189 = vpop.permute.xlu0 %1188
  %1192 = vset.pattern.permute.xlu0 0
  %1193 = vperm.xlu0 %1192, %v1149
  %v1194 = vpop.permute.xlu0 %1193
  %1197 = vset.pattern.permute.xlu0 0
  %1198 = vperm.xlu0 %1197, %v1150
  %v1199 = vpop.permute.xlu0 %1198
  %1202 = vset.pattern.permute.xlu0 0
  %1203 = vperm.xlu0 %1202, %v1151
  %v1204 = vpop.permute.xlu0 %1203
  %1207 = vset.pattern.permute.xlu0 0
  %1208 = vperm.xlu0 %1207, %v1152
  %v1209 = vpop.permute.xlu0 %1208
  %1212 = vset.pattern.permute.xlu0 0
  %1213 = vperm.xlu0 %1212, %v1153
  %v1214 = vpop.permute.xlu0 %1213
  %1217 = vset.pattern.permute.xlu0 0
  %1218 = vperm.xlu0 %1217, %v1154
  %v1219 = vpop.permute.xlu0 %1218
  %1222 = vset.pattern.permute.xlu0 0
  %1223 = vperm.xlu0 %1222, %v1155
  %v1224 = vpop.permute.xlu0 %1223
  %v1226 = vmul.f32 %v1159, %v1074
  %v1227 = vmul.f32 %v1164, %v1079
  %v1228 = vmul.f32 %v1169, %v1084
  %v1229 = vmul.f32 %v1174, %v1089
  %v1230 = vmul.f32 %v1179, %v1094
  %v1231 = vmul.f32 %v1184, %v1099
  %v1232 = vmul.f32 %v1189, %v1104
  %v1233 = vmul.f32 %v1194, %v1109
  %v1234 = vmul.f32 %v1199, %v1114
  %v1235 = vmul.f32 %v1204, %v1119
  %v1236 = vmul.f32 %v1209, %v1124
  %v1237 = vmul.f32 %v1214, %v1129
  %v1238 = vmul.f32 %v1219, %v1134
  %v1239 = vmul.f32 %v1224, %v1139
  %v1240 = vadd.f32 %v1226, %v22
  %v1241 = vadd.f32 %v1227, %v23
  %v1242 = vadd.f32 %v1228, %v24
  %v1243 = vadd.f32 %v1229, %v25
  %v1244 = vadd.f32 %v1230, %v26
  %v1245 = vadd.f32 %v1231, %v27
  %v1246 = vadd.f32 %v1232, %v28
  %v1247 = vadd.f32 %v1233, %v29
  %v1248 = vadd.f32 %v1234, %v30
  %v1249 = vadd.f32 %v1235, %v31
  %v1250 = vadd.f32 %v1236, %v32
  %v1251 = vadd.f32 %v1237, %v33
  %v1252 = vadd.f32 %v1238, %v34
  %v1253 = vadd.f32 %v1239, %v35
  %1254 = vst.msk [vmem:[%s5] sm:$0xff] %vm45, %v1240
  %1255 = vst.msk [vmem:[%s5 + $0x8] sm:$0xff] %vm45, %v1241
  %1256 = vst.msk [vmem:[%s5 + $0x10] sm:$0xff] %vm45, %v1242
  %1257 = vst.msk [vmem:[%s5 + $0x18] sm:$0xff] %vm45, %v1243
  %1258 = vst.msk [vmem:[%s5 + $0x20] sm:$0xff] %vm45, %v1244
  %1259 = vst.msk [vmem:[%s5 + $0x28] sm:$0xff] %vm45, %v1245
  %1260 = vst.msk [vmem:[%s5 + $0x30] sm:$0xff] %vm45, %v1246
  %1261 = vst.msk [vmem:[%s5 + $0x38] sm:$0xff] %vm45, %v1247
  %1262 = vst.msk [vmem:[%s5 + $0x40] sm:$0xff] %vm45, %v1248
  %1263 = vst.msk [vmem:[%s5 + $0x48] sm:$0xff] %vm45, %v1249
  %1264 = vst.msk [vmem:[%s5 + $0x50] sm:$0xff] %vm45, %v1250
  %1265 = vst.msk [vmem:[%s5 + $0x58] sm:$0xff] %vm45, %v1251
  %1266 = vst.msk [vmem:[%s5 + $0x60] sm:$0xff] %vm45, %v1252
  %1267 = vst.msk [vmem:[%s5 + $0x68] sm:$0xff] %vm45, %v1253
  %1268 = vst.msk [vmem:[%s6] sm:$0xff] %vm45, %v1074
  %1269 = vst.msk [vmem:[%s6 + $0x8] sm:$0xff] %vm45, %v1079
  %1270 = vst.msk [vmem:[%s6 + $0x10] sm:$0xff] %vm45, %v1084
  %1271 = vst.msk [vmem:[%s6 + $0x18] sm:$0xff] %vm45, %v1089
  %1272 = vst.msk [vmem:[%s6 + $0x20] sm:$0xff] %vm45, %v1094
  %1273 = vst.msk [vmem:[%s6 + $0x28] sm:$0xff] %vm45, %v1099
  %1274 = vst.msk [vmem:[%s6 + $0x30] sm:$0xff] %vm45, %v1104
  %1275 = vst.msk [vmem:[%s6 + $0x38] sm:$0xff] %vm45, %v1109
  %1276 = vst.msk [vmem:[%s6 + $0x40] sm:$0xff] %vm45, %v1114
  %1277 = vst.msk [vmem:[%s6 + $0x48] sm:$0xff] %vm45, %v1119
  %1278 = vst.msk [vmem:[%s6 + $0x50] sm:$0xff] %vm45, %v1124
  %1279 = vst.msk [vmem:[%s6 + $0x58] sm:$0xff] %vm45, %v1129
  %1280 = vst.msk [vmem:[%s6 + $0x60] sm:$0xff] %vm45, %v1134
  %1281 = vst.msk [vmem:[%s6 + $0x68] sm:$0xff] %vm45, %v1139
  // Predicated region
  $region22: #{modulated_att_forward.1} parent=0 // pred_check
    _
  $region23: #{modulated_att_forward.1} parent=0 // pred_check_branch
    %1283 = sbr.rel (0) target = $region25
  $region24: #{modulated_att_forward.1} parent=0 // pred_region
    _
  $region25: #{modulated_att_forward.1} parent=0 // pred_fallthru
    _
  // Predicated region
  $region26: #{modulated_att_forward.1} parent=0 // pred_check
    _
  $region27: #{modulated_att_forward.1} parent=0 // pred_check_branch
    %1285 = sbr.rel (0) target = $region29
  $region28: #{modulated_att_forward.1} parent=0 // pred_region
    _
  $region29: #{modulated_att_forward.1} parent=0 // pred_fallthru
    _
  // Predicated region
  $region30: #{modulated_att_forward.1} parent=0 // pred_check
    _
  $region31: #{modulated_att_forward.1} parent=0 // pred_check_branch
    %1287 = sbr.rel (0) target = $region33
  $region32: #{modulated_att_forward.1} parent=0 // pred_region
    _
  $region33: #{modulated_att_forward.1} parent=0 // pred_fallthru
    _
  // Predicated region
  $region34: #{modulated_att_forward.1} parent=0 // pred_check
    _
  $region35: #{modulated_att_forward.1} parent=0 // pred_check_branch
    %1289 = sbr.rel (0) target = $region37
  $region36: #{modulated_att_forward.1} parent=0 // pred_region
    _
  $region37: #{modulated_att_forward.1} parent=0 // pred_fallthru
    _

// kernel: modulated_att_forward.1
$region0: #{modulated_att_forward.1}
  #allocation0 [shape = 'u32[]', space=smem, size = 0x4, offset = 0x4, fixed_abs, tag = 'smem constant byte address 0x4 - core index']
  #allocation1 [shape = 'u32[144,128]{1,0:T(1,128)}', space=vmem, size = 0x12000, scoped, tag = 'internal scratch']
  %s0 = inlined_call_operand.vmem [shape: f32[112,16], index: 0, kind: input, shape index: {}]
  %s1 = inlined_call_operand.vmem [shape: f32[112,1], index: 1, kind: input, shape index: {}]
  %s2 = inlined_call_operand.vmem [shape: f32[16,24], index: 2, kind: input, shape index: {}]
  %s3 = inlined_call_operand.vmem [shape: f32[1,24], index: 3, kind: input, shape index: {}]
  %s4 = inlined_call_operand.vmem [shape: f32[8,16], index: 4, kind: input, shape index: {}]
  %s5 = inlined_call_operand.vmem [shape: f32[112,16], index: 5, kind: output, shape index: {0}]
  %s6 = inlined_call_operand.vmem [shape: f32[112,16], index: 6, kind: output, shape index: {1}]
  %7 = xla_tuple %s5, %s6
  %s8 = sld [smem:[#allocation0]]
  $region38: #{modulated_att_forward.1} parent=0
    _
  %s10 = ssub.s32 1, %s8
  %s11 = scalar_select 0, %s10, %s8
  // Predicated region
  $region2: #{modulated_att_forward.1} parent=0 // pred_check
    _
  $region3: #{modulated_att_forward.1} parent=0 // pred_check_branch
    %13 = sbr.rel (0) target = $region5
  $region4: #{modulated_att_forward.1} parent=0 // pred_region
    _
  $region5: #{modulated_att_forward.1} parent=0 // pred_fallthru
    _
  // Predicated region
  $region6: #{modulated_att_forward.1} parent=0 // pred_check
    _
  $region7: #{modulated_att_forward.1} parent=0 // pred_check_branch
    %15 = sbr.rel (0) target = $region9
  $region8: #{modulated_att_forward.1} parent=0 // pred_region
    _
  $region9: #{modulated_att_forward.1} parent=0 // pred_fallthru
    _
  // Predicated region
  $region10: #{modulated_att_forward.1} parent=0 // pred_check
    _
  $region11: #{modulated_att_forward.1} parent=0 // pred_check_branch
    %17 = sbr.rel (0) target = $region13
  $region12: #{modulated_att_forward.1} parent=0 // pred_region
    _
  $region13: #{modulated_att_forward.1} parent=0 // pred_fallthru
    _
  // Predicated region
  $region14: #{modulated_att_forward.1} parent=0 // pred_check
    _
  $region15: #{modulated_att_forward.1} parent=0 // pred_check_branch
    %19 = sbr.rel (0) target = $region17
  $region16: #{modulated_att_forward.1} parent=0 // pred_region
    _
  $region17: #{modulated_att_forward.1} parent=0 // pred_fallthru
    _
  // Predicated region
  $region18: #{modulated_att_forward.1} parent=0 // pred_check
    _
  $region19: #{modulated_att_forward.1} parent=0 // pred_check_branch
    %21 = sbr.rel (0) target = $region21
  $region20: #{modulated_att_forward.1} parent=0 // pred_region
    _
  $region21: #{modulated_att_forward.1} parent=0 // pred_fallthru
    _
  %v22 = vld [vmem:[%s0] sm:$0xff]
  %v23 = vld [vmem:[%s0 + $0x8] sm:$0xff]
  %v24 = vld [vmem:[%s0 + $0x10] sm:$0xff]
  %v25 = vld [vmem:[%s0 + $0x18] sm:$0xff]
  %v26 = vld [vmem:[%s0 + $0x20] sm:$0xff]
  %v27 = vld [vmem:[%s0 + $0x28] sm:$0xff]
  %v28 = vld [vmem:[%s0 + $0x30] sm:$0xff]
  %v29 = vld [vmem:[%s0 + $0x38] sm:$0xff]
  %v30 = vld [vmem:[%s0 + $0x40] sm:$0xff]
  %v31 = vld [vmem:[%s0 + $0x48] sm:$0xff]
  %v32 = vld [vmem:[%s0 + $0x50] sm:$0xff]
  %v33 = vld [vmem:[%s0 + $0x58] sm:$0xff]
  %v34 = vld [vmem:[%s0 + $0x60] sm:$0xff]
  %v35 = vld [vmem:[%s0 + $0x68] sm:$0xff]
  %v36 = vld [vmem:[%s2] sm:$0xff]
  %v37 = vld [vmem:[%s2 + $0x8] sm:$0xff]
  %v38 = vld [vmem:[%s3] sm:$0x1]
  %v40 = vlaneseq
  %v41 = vshrl.u32 %v40, 7
  %v42 = vsub.s32 0, %v41
  %v43 = vrot.slane %v38, %v42
  %vm45 = vcmask 130048
  %v47 = vsel %vm45, %v22, 0
  %v50 = vsel %vm45, %v23, 0
  %v53 = vsel %vm45, %v24, 0
  %v56 = vsel %vm45, %v25, 0
  %v59 = vsel %vm45, %v26, 0
  %v62 = vsel %vm45, %v27, 0
  %v65 = vsel %vm45, %v28, 0
  %v68 = vsel %vm45, %v29, 0
  %v71 = vsel %vm45, %v30, 0
  %v74 = vsel %vm45, %v31, 0
  %v77 = vsel %vm45, %v32, 0
  %v80 = vsel %vm45, %v33, 0
  %v83 = vsel %vm45, %v34, 0
  %v86 = vsel %vm45, %v35, 0
  %88 = vmatprep.subr.mxu0 0.0
  %89 = vmatpush1.msra.mxu0 0.0
  %90 = vmatprep.subr.mxu0 0.0
  %91 = vmatpush1.msra.mxu0 0.0
  %92 = vmatprep.subr.mxu0 0.0
  %93 = vmatpush1.msra.mxu0 0.0
  %94 = vmatprep.subr.mxu0 0.0
  %95 = vmatpush1.msra.mxu0 0.0
  %96 = vmatprep.subr.mxu0 0.0
  %97 = vmatpush1.msra.mxu0 0.0
  %98 = vmatprep.subr.mxu0 0.0
  %99 = vmatpush1.msra.mxu0 0.0
  %100 = vmatprep.subr.mxu0 0.0
  %101 = vmatpush1.msra.mxu0 0.0
  %102 = vmatprep.subr.mxu0 0.0
  %103 = vmatpush1.msra.mxu0 0.0
  %104 = vmatprep.subr.mxu0 0.0
  %105 = vmatpush1.msra.mxu0 0.0
  %106 = vmatprep.subr.mxu0 0.0
  %107 = vmatpush1.msra.mxu0 0.0
  %108 = vmatprep.subr.mxu0 0.0
  %109 = vmatpush1.msra.mxu0 0.0
  %110 = vmatprep.subr.mxu0 0.0
  %111 = vmatpush1.msra.mxu0 0.0
  %112 = vmatprep.subr.mxu0 0.0
  %113 = vmatpush1.msra.mxu0 0.0
  %114 = vmatprep.subr.mxu0 0.0
  %115 = vmatpush1.msra.mxu0 0.0
  %116 = vmatprep.subr.mxu0 0.0
  %117 = vmatpush1.msra.mxu0 %v37
  %118 = vmatprep.subr.mxu0 0.0
  %119 = vmatpush1.msra.mxu0 %v36
  %120 = vmatprep.subr.mxu0 0.0
  %121 = vmatpush2.msra.mxu0 0.0
  %122 = vmatprep.subr.mxu0 0.0
  %123 = vmatpush2.msra.mxu0 0.0
  %124 = vmatprep.subr.mxu0 0.0
  %125 = vmatpush2.msra.mxu0 0.0
  %126 = vmatprep.subr.mxu0 0.0
  %127 = vmatpush2.msra.mxu0 0.0
  %128 = vmatprep.subr.mxu0 0.0
  %129 = vmatpush2.msra.mxu0 0.0
  %130 = vmatprep.subr.mxu0 0.0
  %131 = vmatpush2.msra.mxu0 0.0
  %132 = vmatprep.subr.mxu0 0.0
  %133 = vmatpush2.msra.mxu0 0.0
  %134 = vmatprep.subr.mxu0 0.0
  %135 = vmatpush2.msra.mxu0 0.0
  %136 = vmatprep.subr.mxu0 0.0
  %137 = vmatpush2.msra.mxu0 0.0
  %138 = vmatprep.subr.mxu0 0.0
  %139 = vmatpush2.msra.mxu0 0.0
  %140 = vmatprep.subr.mxu0 0.0
  %141 = vmatpush2.msra.mxu0 0.0
  %142 = vmatprep.subr.mxu0 0.0
  %143 = vmatpush2.msra.mxu0 0.0
  %144 = vmatprep.subr.mxu0 0.0
  %145 = vmatpush2.msra.mxu0 0.0
  %146 = vmatprep.subr.mxu0 0.0
  %147 = vmatpush2.msra.mxu0 0.0
  %148 = vmatprep.subr.mxu0 0.0
  %149 = vmatpush2.msra.mxu0 0.0
  %150 = vmatprep.subr.mxu0 0.0
  %151 = vmatpush2.msra.mxu0 0.0
  %152 = vmatprep.mubr.f32.mxu0 0.0
  %153 = vmatmul.mubr.f32.gmra.mxu0 %v47
  %v154 = vpop.f32.mrf.mxu0
  %v155 = vadd.f32 %v43, %v154
  %v156 = vpop.f32.mrf.mxu0
  %157 = vmatprep.mubr.f32.mxu0 0.0
  %158 = vmatmul.mubr.f32.gmra.mxu0 %v50
  %v159 = vpop.f32.mrf.mxu0
  %v160 = vadd.f32 %v43, %v159
  %v161 = vpop.f32.mrf.mxu0
  %162 = vmatprep.mubr.f32.mxu0 0.0
  %163 = vmatmul.mubr.f32.gmra.mxu0 %v53
  %v164 = vpop.f32.mrf.mxu0
  %v165 = vadd.f32 %v43, %v164
  %v166 = vpop.f32.mrf.mxu0
  %167 = vmatprep.mubr.f32.mxu0 0.0
  %168 = vmatmul.mubr.f32.gmra.mxu0 %v56
  %v169 = vpop.f32.mrf.mxu0
  %v170 = vadd.f32 %v43, %v169
  %v171 = vpop.f32.mrf.mxu0
  %172 = vmatprep.mubr.f32.mxu0 0.0
  %173 = vmatmul.mubr.f32.gmra.mxu0 %v59
  %v174 = vpop.f32.mrf.mxu0
  %v175 = vadd.f32 %v43, %v174
  %v176 = vpop.f32.mrf.mxu0
  %177 = vmatprep.mubr.f32.mxu0 0.0
  %178 = vmatmul.mubr.f32.gmra.mxu0 %v62
  %v179 = vpop.f32.mrf.mxu0
  %v180 = vadd.f32 %v43, %v179
  %v181 = vpop.f32.mrf.mxu0
  %182 = vmatprep.mubr.f32.mxu0 0.0
  %183 = vmatmul.mubr.f32.gmra.mxu0 %v65
  %v184 = vpop.f32.mrf.mxu0
  %v185 = vadd.f32 %v43, %v184
  %v186 = vpop.f32.mrf.mxu0
  %187 = vmatprep.mubr.f32.mxu0 0.0
  %188 = vmatmul.mubr.f32.gmra.mxu0 %v68
  %v189 = vpop.f32.mrf.mxu0
  %v190 = vadd.f32 %v43, %v189
  %v191 = vpop.f32.mrf.mxu0
  %192 = vmatprep.mubr.f32.mxu0 0.0
  %193 = vmatmul.mubr.f32.gmra.mxu0 %v71
  %v194 = vpop.f32.mrf.mxu0
  %v195 = vadd.f32 %v43, %v194
  %v196 = vpop.f32.mrf.mxu0
  %197 = vmatprep.mubr.f32.mxu0 0.0
  %198 = vmatmul.mubr.f32.gmra.mxu0 %v74
  %v199 = vpop.f32.mrf.mxu0
  %v200 = vadd.f32 %v43, %v199
  %v201 = vpop.f32.mrf.mxu0
  %202 = vmatprep.mubr.f32.mxu0 0.0
  %203 = vmatmul.mubr.f32.gmra.mxu0 %v77
  %v204 = vpop.f32.mrf.mxu0
  %v205 = vadd.f32 %v43, %v204
  %v206 = vpop.f32.mrf.mxu0
  %207 = vmatprep.mubr.f32.mxu0 0.0
  %208 = vmatmul.mubr.f32.gmra.mxu0 %v80
  %v209 = vpop.f32.mrf.mxu0
  %v210 = vadd.f32 %v43, %v209
  %v211 = vpop.f32.mrf.mxu0
  %212 = vmatprep.mubr.f32.mxu0 0.0
  %213 = vmatmul.mubr.f32.gmra.mxu0 %v83
  %v214 = vpop.f32.mrf.mxu0
  %v215 = vadd.f32 %v43, %v214
  %v216 = vpop.f32.mrf.mxu0
  %217 = vmatprep.mubr.f32.mxu0 0.0
  %218 = vmatmul.mubr.f32.gmra.mxu0 %v86
  %v219 = vpop.f32.mrf.mxu0
  %v220 = vadd.f32 %v43, %v219
  %v221 = vpop.f32.mrf.mxu0
  %222 = vdwg.mxu0
  %230 = vrot.lane.b32.xlu0 %v155, 120
  %v231 = vpop.permute.xlu0 %230
  %232 = vrot.lane.b32.xlu0 %v160, 120
  %v233 = vpop.permute.xlu0 %232
  %234 = vrot.lane.b32.xlu0 %v165, 120
  %v235 = vpop.permute.xlu0 %234
  %236 = vrot.lane.b32.xlu0 %v170, 120
  %v237 = vpop.permute.xlu0 %236
  %238 = vrot.lane.b32.xlu0 %v175, 120
  %v239 = vpop.permute.xlu0 %238
  %240 = vrot.lane.b32.xlu0 %v180, 120
  %v241 = vpop.permute.xlu0 %240
  %242 = vrot.lane.b32.xlu0 %v185, 120
  %v243 = vpop.permute.xlu0 %242
  %244 = vrot.lane.b32.xlu0 %v155, 112
  %v245 = vpop.permute.xlu0 %244
  %246 = vrot.lane.b32.xlu0 %v160, 112
  %v247 = vpop.permute.xlu0 %246
  %248 = vrot.lane.b32.xlu0 %v165, 112
  %v249 = vpop.permute.xlu0 %248
  %250 = vrot.lane.b32.xlu0 %v170, 112
  %v251 = vpop.permute.xlu0 %250
  %252 = vrot.lane.b32.xlu0 %v175, 112
  %v253 = vpop.permute.xlu0 %252
  %254 = vrot.lane.b32.xlu0 %v180, 112
  %v255 = vpop.permute.xlu0 %254
  %256 = vrot.lane.b32.xlu0 %v185, 112
  %v257 = vpop.permute.xlu0 %256
  %vm258 = vcmask 64512
  %v259 = vsel %vm258, %v231, 0
  %v261 = vsel %vm258, %v233, 0
  %v263 = vsel %vm258, %v235, 0
  %v265 = vsel %vm258, %v237, 0
  %v267 = vsel %vm258, %v239, 0
  %v269 = vsel %vm258, %v241, 0
  %v271 = vsel %vm258, %v243, 0
  %v273 = vsel %vm258, %v245, 0
  %v275 = vsel %vm258, %v247, 0
  %v277 = vsel %vm258, %v249, 0
  %v279 = vsel %vm258, %v251, 0
  %v281 = vsel %vm258, %v253, 0
  %v283 = vsel %vm258, %v255, 0
  %v285 = vsel %vm258, %v257, 0
  %287 = vmatprep.subr.mxu0 0.0
  %288 = vmatpush1.xpose.msra.mxu0 0.0
  %289 = vmatprep.subr.mxu0 0.0
  %290 = vmatpush1.xpose.msra.mxu0 0.0
  %291 = vmatprep.subr.mxu0 0.0
  %292 = vmatpush1.xpose.msra.mxu0 0.0
  %293 = vmatprep.subr.mxu0 0.0
  %294 = vmatpush1.xpose.msra.mxu0 0.0
  %295 = vmatprep.subr.mxu0 0.0
  %296 = vmatpush1.xpose.msra.mxu0 0.0
  %297 = vmatprep.subr.mxu0 0.0
  %298 = vmatpush1.xpose.msra.mxu0 0.0
  %299 = vmatprep.subr.mxu0 0.0
  %300 = vmatpush1.xpose.msra.mxu0 0.0
  %301 = vmatprep.subr.mxu0 0.0
  %302 = vmatpush1.xpose.msra.mxu0 0.0
  %303 = vmatprep.subr.mxu0 0.0
  %304 = vmatpush1.xpose.msra.mxu0 0.0
  %305 = vmatprep.subr.mxu0 0.0
  %306 = vmatpush1.xpose.msra.mxu0 %v285
  %307 = vmatprep.subr.mxu0 0.0
  %308 = vmatpush1.xpose.msra.mxu0 %v283
  %309 = vmatprep.subr.mxu0 0.0
  %310 = vmatpush1.xpose.msra.mxu0 %v281
  %311 = vmatprep.subr.mxu0 0.0
  %312 = vmatpush1.xpose.msra.mxu0 %v279
  %313 = vmatprep.subr.mxu0 0.0
  %314 = vmatpush1.xpose.msra.mxu0 %v277
  %315 = vmatprep.subr.mxu0 0.0
  %316 = vmatpush1.xpose.msra.mxu0 %v275
  %317 = vmatprep.subr.mxu0 0.0
  %318 = vmatpush1.xpose.msra.mxu0 %v273
  %319 = vmatprep.subr.mxu0 0.0
  %320 = vmatpush2.xpose.msra.mxu0 0.0
  %321 = vmatprep.subr.mxu0 0.0
  %322 = vmatpush2.xpose.msra.mxu0 0.0
  %323 = vmatprep.subr.mxu0 0.0
  %324 = vmatpush2.xpose.msra.mxu0 0.0
  %325 = vmatprep.subr.mxu0 0.0
  %326 = vmatpush2.xpose.msra.mxu0 0.0
  %327 = vmatprep.subr.mxu0 0.0
  %328 = vmatpush2.xpose.msra.mxu0 0.0
  %329 = vmatprep.subr.mxu0 0.0
  %330 = vmatpush2.xpose.msra.mxu0 0.0
  %331 = vmatprep.subr.mxu0 0.0
  %332 = vmatpush2.xpose.msra.mxu0 0.0
  %333 = vmatprep.subr.mxu0 0.0
  %334 = vmatpush2.xpose.msra.mxu0 0.0
  %335 = vmatprep.subr.mxu0 0.0
  %336 = vmatpush2.xpose.msra.mxu0 0.0
  %337 = vmatprep.subr.mxu0 0.0
  %338 = vmatpush2.xpose.msra.mxu0 0.0
  %339 = vmatprep.subr.mxu0 0.0
  %340 = vmatpush2.xpose.msra.mxu0 0.0
  %341 = vmatprep.subr.mxu0 0.0
  %342 = vmatpush2.xpose.msra.mxu0 0.0
  %343 = vmatprep.subr.mxu0 0.0
  %344 = vmatpush2.xpose.msra.mxu0 0.0
  %345 = vmatprep.subr.mxu0 0.0
  %346 = vmatpush2.xpose.msra.mxu0 0.0
  %347 = vmatprep.subr.mxu0 0.0
  %348 = vmatpush2.xpose.msra.mxu0 0.0
  %349 = vmatprep.subr.mxu0 0.0
  %350 = vmatpush2.xpose.msra.mxu0 0.0
  %351 = vmatprep.mubr.f32.mxu0 0.0
  %352 = vmatmul.mubr.f32.gmra.mxu0 %v259
  %v353 = vpop.f32.mrf.mxu0
  %v354 = vadd.f32 0.0, %v353
  %v355 = vpop.f32.mrf.mxu0
  %356 = vmatprep.mubr.f32.mxu0 0.0
  %357 = vmatmul.mubr.f32.gmra.mxu0 %v261
  %v358 = vpop.f32.mrf.mxu0
  %v359 = vadd.f32 0.0, %v358
  %v360 = vpop.f32.mrf.mxu0
  %361 = vmatprep.mubr.f32.mxu0 0.0
  %362 = vmatmul.mubr.f32.gmra.mxu0 %v263
  %v363 = vpop.f32.mrf.mxu0
  %v364 = vadd.f32 0.0, %v363
  %v365 = vpop.f32.mrf.mxu0
  %366 = vmatprep.mubr.f32.mxu0 0.0
  %367 = vmatmul.mubr.f32.gmra.mxu0 %v265
  %v368 = vpop.f32.mrf.mxu0
  %v369 = vadd.f32 0.0, %v368
  %v370 = vpop.f32.mrf.mxu0
  %371 = vmatprep.mubr.f32.mxu0 0.0
  %372 = vmatmul.mubr.f32.gmra.mxu0 %v267
  %v373 = vpop.f32.mrf.mxu0
  %v374 = vadd.f32 0.0, %v373
  %v375 = vpop.f32.mrf.mxu0
  %376 = vmatprep.mubr.f32.mxu0 0.0
  %377 = vmatmul.mubr.f32.gmra.mxu0 %v269
  %v378 = vpop.f32.mrf.mxu0
  %v379 = vadd.f32 0.0, %v378
  %v380 = vpop.f32.mrf.mxu0
  %381 = vmatprep.mubr.f32.mxu0 0.0
  %382 = vmatmul.mubr.f32.gmra.mxu0 %v271
  %v383 = vpop.f32.mrf.mxu0
  %v384 = vadd.f32 0.0, %v383
  %v385 = vpop.f32.mrf.mxu0
  %386 = vdwg.mxu0
  %394 = vrot.lane.b32.xlu0 %v190, 120
  %v395 = vpop.permute.xlu0 %394
  %396 = vrot.lane.b32.xlu0 %v195, 120
  %v397 = vpop.permute.xlu0 %396
  %398 = vrot.lane.b32.xlu0 %v200, 120
  %v399 = vpop.permute.xlu0 %398
  %400 = vrot.lane.b32.xlu0 %v205, 120
  %v401 = vpop.permute.xlu0 %400
  %402 = vrot.lane.b32.xlu0 %v210, 120
  %v403 = vpop.permute.xlu0 %402
  %404 = vrot.lane.b32.xlu0 %v215, 120
  %v405 = vpop.permute.xlu0 %404
  %406 = vrot.lane.b32.xlu0 %v220, 120
  %v407 = vpop.permute.xlu0 %406
  %408 = vrot.lane.b32.xlu0 %v190, 112
  %v409 = vpop.permute.xlu0 %408
  %410 = vrot.lane.b32.xlu0 %v195, 112
  %v411 = vpop.permute.xlu0 %410
  %412 = vrot.lane.b32.xlu0 %v200, 112
  %v413 = vpop.permute.xlu0 %412
  %414 = vrot.lane.b32.xlu0 %v205, 112
  %v415 = vpop.permute.xlu0 %414
  %416 = vrot.lane.b32.xlu0 %v210, 112
  %v417 = vpop.permute.xlu0 %416
  %418 = vrot.lane.b32.xlu0 %v215, 112
  %v419 = vpop.permute.xlu0 %418
  %420 = vrot.lane.b32.xlu0 %v220, 112
  %v421 = vpop.permute.xlu0 %420
  %v422 = vsel %vm258, %v395, 0
  %v424 = vsel %vm258, %v397, 0
  %v426 = vsel %vm258, %v399, 0
  %v428 = vsel %vm258, %v401, 0
  %v430 = vsel %vm258, %v403, 0
  %v432 = vsel %vm258, %v405, 0
  %v434 = vsel %vm258, %v407, 0
  %v436 = vsel %vm258, %v409, 0
  %v438 = vsel %vm258, %v411, 0
  %v440 = vsel %vm258, %v413, 0
  %v442 = vsel %vm258, %v415, 0
  %v444 = vsel %vm258, %v417, 0
  %v446 = vsel %vm258, %v419, 0
  %v448 = vsel %vm258, %v421, 0
  %450 = vmatprep.subr.mxu0 0.0
  %451 = vmatpush1.xpose.msra.mxu0 0.0
  %452 = vmatprep.subr.mxu0 0.0
  %453 = vmatpush1.xpose.msra.mxu0 0.0
  %454 = vmatprep.subr.mxu0 0.0
  %455 = vmatpush1.xpose.msra.mxu0 0.0
  %456 = vmatprep.subr.mxu0 0.0
  %457 = vmatpush1.xpose.msra.mxu0 0.0
  %458 = vmatprep.subr.mxu0 0.0
  %459 = vmatpush1.xpose.msra.mxu0 0.0
  %460 = vmatprep.subr.mxu0 0.0
  %461 = vmatpush1.xpose.msra.mxu0 0.0
  %462 = vmatprep.subr.mxu0 0.0
  %463 = vmatpush1.xpose.msra.mxu0 0.0
  %464 = vmatprep.subr.mxu0 0.0
  %465 = vmatpush1.xpose.msra.mxu0 0.0
  %466 = vmatprep.subr.mxu0 0.0
  %467 = vmatpush1.xpose.msra.mxu0 0.0
  %468 = vmatprep.subr.mxu0 0.0
  %469 = vmatpush1.xpose.msra.mxu0 %v448
  %470 = vmatprep.subr.mxu0 0.0
  %471 = vmatpush1.xpose.msra.mxu0 %v446
  %472 = vmatprep.subr.mxu0 0.0
  %473 = vmatpush1.xpose.msra.mxu0 %v444
  %474 = vmatprep.subr.mxu0 0.0
  %475 = vmatpush1.xpose.msra.mxu0 %v442
  %476 = vmatprep.subr.mxu0 0.0
  %477 = vmatpush1.xpose.msra.mxu0 %v440
  %478 = vmatprep.subr.mxu0 0.0
  %479 = vmatpush1.xpose.msra.mxu0 %v438
  %480 = vmatprep.subr.mxu0 0.0
  %481 = vmatpush1.xpose.msra.mxu0 %v436
  %482 = vmatprep.subr.mxu0 0.0
  %483 = vmatpush2.xpose.msra.mxu0 0.0
  %484 = vmatprep.subr.mxu0 0.0
  %485 = vmatpush2.xpose.msra.mxu0 0.0
  %486 = vmatprep.subr.mxu0 0.0
  %487 = vmatpush2.xpose.msra.mxu0 0.0
  %488 = vmatprep.subr.mxu0 0.0
  %489 = vmatpush2.xpose.msra.mxu0 0.0
  %490 = vmatprep.subr.mxu0 0.0
  %491 = vmatpush2.xpose.msra.mxu0 0.0
  %492 = vmatprep.subr.mxu0 0.0
  %493 = vmatpush2.xpose.msra.mxu0 0.0
  %494 = vmatprep.subr.mxu0 0.0
  %495 = vmatpush2.xpose.msra.mxu0 0.0
  %496 = vmatprep.subr.mxu0 0.0
  %497 = vmatpush2.xpose.msra.mxu0 0.0
  %498 = vmatprep.subr.mxu0 0.0
  %499 = vmatpush2.xpose.msra.mxu0 0.0
  %500 = vmatprep.subr.mxu0 0.0
  %501 = vmatpush2.xpose.msra.mxu0 0.0
  %502 = vmatprep.subr.mxu0 0.0
  %503 = vmatpush2.xpose.msra.mxu0 0.0
  %504 = vmatprep.subr.mxu0 0.0
  %505 = vmatpush2.xpose.msra.mxu0 0.0
  %506 = vmatprep.subr.mxu0 0.0
  %507 = vmatpush2.xpose.msra.mxu0 0.0
  %508 = vmatprep.subr.mxu0 0.0
  %509 = vmatpush2.xpose.msra.mxu0 0.0
  %510 = vmatprep.subr.mxu0 0.0
  %511 = vmatpush2.xpose.msra.mxu0 0.0
  %512 = vmatprep.subr.mxu0 0.0
  %513 = vmatpush2.xpose.msra.mxu0 0.0
  %514 = vmatprep.mubr.f32.mxu0 0.0
  %515 = vmatmul.mubr.f32.gmra.mxu0 %v422
  %v516 = vpop.f32.mrf.mxu0
  %v517 = vadd.f32 0.0, %v516
  %v518 = vpop.f32.mrf.mxu0
  %519 = vmatprep.mubr.f32.mxu0 0.0
  %520 = vmatmul.mubr.f32.gmra.mxu0 %v424
  %v521 = vpop.f32.mrf.mxu0
  %v522 = vadd.f32 0.0, %v521
  %v523 = vpop.f32.mrf.mxu0
  %524 = vmatprep.mubr.f32.mxu0 0.0
  %525 = vmatmul.mubr.f32.gmra.mxu0 %v426
  %v526 = vpop.f32.mrf.mxu0
  %v527 = vadd.f32 0.0, %v526
  %v528 = vpop.f32.mrf.mxu0
  %529 = vmatprep.mubr.f32.mxu0 0.0
  %530 = vmatmul.mubr.f32.gmra.mxu0 %v428
  %v531 = vpop.f32.mrf.mxu0
  %v532 = vadd.f32 0.0, %v531
  %v533 = vpop.f32.mrf.mxu0
  %534 = vmatprep.mubr.f32.mxu0 0.0
  %535 = vmatmul.mubr.f32.gmra.mxu0 %v430
  %v536 = vpop.f32.mrf.mxu0
  %v537 = vadd.f32 0.0, %v536
  %v538 = vpop.f32.mrf.mxu0
  %539 = vmatprep.mubr.f32.mxu0 0.0
  %540 = vmatmul.mubr.f32.gmra.mxu0 %v432
  %v541 = vpop.f32.mrf.mxu0
  %v542 = vadd.f32 0.0, %v541
  %v543 = vpop.f32.mrf.mxu0
  %544 = vmatprep.mubr.f32.mxu0 0.0
  %545 = vmatmul.mubr.f32.gmra.mxu0 %v434
  %v546 = vpop.f32.mrf.mxu0
  %v547 = vadd.f32 0.0, %v546
  %v548 = vpop.f32.mrf.mxu0
  %549 = vdwg.mxu0
  %v550 = vlaneseq
  %v551 = vand.u32 %v550, 127
  %vm552 = vcmp.lt.s32.totalorder %v551, 49
  %v553 = vsel %vm552, %v354, -1e+30
  %v554 = vsel %vm552, %v359, -1e+30
  %v555 = vsel %vm552, %v364, -1e+30
  %v556 = vsel %vm552, %v369, -1e+30
  %v557 = vsel %vm552, %v374, -1e+30
  %v558 = vsel %vm552, %v379, -1e+30
  %v559 = vsel %vm552, %v384, -1e+30
  %v560 = vsel %vm552, %v517, -1e+30
  %v561 = vsel %vm552, %v522, -1e+30
  %v562 = vsel %vm552, %v527, -1e+30
  %v563 = vsel %vm552, %v532, -1e+30
  %v564 = vsel %vm552, %v537, -1e+30
  %v565 = vsel %vm552, %v542, -1e+30
  %v566 = vsel %vm552, %v547, -1e+30
  %vm567 = vcmask 457728
  %v568 = vsel %vm567, %v553, -inf
  %569 = vmax.xlane.f32.xlu0 %v568
  %v570 = vpop.xlane.xlu0 %569
  %v571 = vsel %vm567, %v554, -inf
  %572 = vmax.xlane.f32.xlu0 %v571
  %v573 = vpop.xlane.xlu0 %572
  %v574 = vsel %vm567, %v555, -inf
  %575 = vmax.xlane.f32.xlu0 %v574
  %v576 = vpop.xlane.xlu0 %575
  %v577 = vsel %vm567, %v556, -inf
  %578 = vmax.xlane.f32.xlu0 %v577
  %v579 = vpop.xlane.xlu0 %578
  %v580 = vsel %vm567, %v557, -inf
  %581 = vmax.xlane.f32.xlu0 %v580
  %v582 = vpop.xlane.xlu0 %581
  %v583 = vsel %vm567, %v558, -inf
  %584 = vmax.xlane.f32.xlu0 %v583
  %v585 = vpop.xlane.xlu0 %584
  %v586 = vsel %vm567, %v559, -inf
  %587 = vmax.xlane.f32.xlu0 %v586
  %v588 = vpop.xlane.xlu0 %587
  %v589 = vsel %vm567, %v560, -inf
  %590 = vmax.xlane.f32.xlu0 %v589
  %v591 = vpop.xlane.xlu0 %590
  %v592 = vsel %vm567, %v561, -inf
  %593 = vmax.xlane.f32.xlu0 %v592
  %v594 = vpop.xlane.xlu0 %593
  %v595 = vsel %vm567, %v562, -inf
  %596 = vmax.xlane.f32.xlu0 %v595
  %v597 = vpop.xlane.xlu0 %596
  %v598 = vsel %vm567, %v563, -inf
  %599 = vmax.xlane.f32.xlu0 %v598
  %v600 = vpop.xlane.xlu0 %599
  %v601 = vsel %vm567, %v564, -inf
  %602 = vmax.xlane.f32.xlu0 %v601
  %v603 = vpop.xlane.xlu0 %602
  %v604 = vsel %vm567, %v565, -inf
  %605 = vmax.xlane.f32.xlu0 %v604
  %v606 = vpop.xlane.xlu0 %605
  %v607 = vsel %vm567, %v566, -inf
  %608 = vmax.xlane.f32.xlu0 %v607
  %v609 = vpop.xlane.xlu0 %608
  %v610 = vsub.f32 %v553, %v570
  %v611 = vsub.f32 %v554, %v573
  %v612 = vsub.f32 %v555, %v576
  %v613 = vsub.f32 %v556, %v579
  %v614 = vsub.f32 %v557, %v582
  %v615 = vsub.f32 %v558, %v585
  %v616 = vsub.f32 %v559, %v588
  %v617 = vsub.f32 %v560, %v591
  %v618 = vsub.f32 %v561, %v594
  %v619 = vsub.f32 %v562, %v597
  %v620 = vsub.f32 %v563, %v600
  %v621 = vsub.f32 %v564, %v603
  %v622 = vsub.f32 %v565, %v606
  %v623 = vsub.f32 %v566, %v609
  %v624 = vmul.f32 %v610, 1.442695
  %v625 = vpow.pop %v624
  %v626 = vmul.f32 %v611, 1.442695
  %v627 = vpow.pop %v626
  %v628 = vmul.f32 %v612, 1.442695
  %v629 = vpow.pop %v628
  %v630 = vmul.f32 %v613, 1.442695
  %v631 = vpow.pop %v630
  %v632 = vmul.f32 %v614, 1.442695
  %v633 = vpow.pop %v632
  %v634 = vmul.f32 %v615, 1.442695
  %v635 = vpow.pop %v634
  %v636 = vmul.f32 %v616, 1.442695
  %v637 = vpow.pop %v636
  %v638 = vmul.f32 %v617, 1.442695
  %v639 = vpow.pop %v638
  %v640 = vmul.f32 %v618, 1.442695
  %v641 = vpow.pop %v640
  %v642 = vmul.f32 %v619, 1.442695
  %v643 = vpow.pop %v642
  %v644 = vmul.f32 %v620, 1.442695
  %v645 = vpow.pop %v644
  %v646 = vmul.f32 %v621, 1.442695
  %v647 = vpow.pop %v646
  %v648 = vmul.f32 %v622, 1.442695
  %v649 = vpow.pop %v648
  %v650 = vmul.f32 %v623, 1.442695
  %v651 = vpow.pop %v650
  %v652 = vsel %vm567, %v625, 0.0
  %653 = vadd.xlane.f32.xlu0 %v652
  %v654 = vpop.xlane.xlu0 %653
  %v655 = vsel %vm567, %v627, 0.0
  %656 = vadd.xlane.f32.xlu0 %v655
  %v657 = vpop.xlane.xlu0 %656
  %v658 = vsel %vm567, %v629, 0.0
  %659 = vadd.xlane.f32.xlu0 %v658
  %v660 = vpop.xlane.xlu0 %659
  %v661 = vsel %vm567, %v631, 0.0
  %662 = vadd.xlane.f32.xlu0 %v661
  %v663 = vpop.xlane.xlu0 %662
  %v664 = vsel %vm567, %v633, 0.0
  %665 = vadd.xlane.f32.xlu0 %v664
  %v666 = vpop.xlane.xlu0 %665
  %v667 = vsel %vm567, %v635, 0.0
  %668 = vadd.xlane.f32.xlu0 %v667
  %v669 = vpop.xlane.xlu0 %668
  %v670 = vsel %vm567, %v637, 0.0
  %671 = vadd.xlane.f32.xlu0 %v670
  %v672 = vpop.xlane.xlu0 %671
  %v673 = vsel %vm567, %v639, 0.0
  %674 = vadd.xlane.f32.xlu0 %v673
  %v675 = vpop.xlane.xlu0 %674
  %v676 = vsel %vm567, %v641, 0.0
  %677 = vadd.xlane.f32.xlu0 %v676
  %v678 = vpop.xlane.xlu0 %677
  %v679 = vsel %vm567, %v643, 0.0
  %680 = vadd.xlane.f32.xlu0 %v679
  %v681 = vpop.xlane.xlu0 %680
  %v682 = vsel %vm567, %v645, 0.0
  %683 = vadd.xlane.f32.xlu0 %v682
  %v684 = vpop.xlane.xlu0 %683
  %v685 = vsel %vm567, %v647, 0.0
  %686 = vadd.xlane.f32.xlu0 %v685
  %v687 = vpop.xlane.xlu0 %686
  %v688 = vsel %vm567, %v649, 0.0
  %689 = vadd.xlane.f32.xlu0 %v688
  %v690 = vpop.xlane.xlu0 %689
  %v691 = vsel %vm567, %v651, 0.0
  %692 = vadd.xlane.f32.xlu0 %v691
  %v693 = vpop.xlane.xlu0 %692
  %v694 = vrcp.pop %v654
  %v695 = vrcp.pop %v657
  %v696 = vrcp.pop %v660
  %v697 = vrcp.pop %v663
  %v698 = vrcp.pop %v666
  %v699 = vrcp.pop %v669
  %v700 = vrcp.pop %v672
  %v701 = vrcp.pop %v675
  %v702 = vrcp.pop %v678
  %v703 = vrcp.pop %v681
  %v704 = vrcp.pop %v684
  %v705 = vrcp.pop %v687
  %v706 = vrcp.pop %v690
  %v707 = vrcp.pop %v693
  %v708 = vmul.f32 %v625, %v694
  %v709 = vmul.f32 %v627, %v695
  %v710 = vmul.f32 %v629, %v696
  %v711 = vmul.f32 %v631, %v697
  %v712 = vmul.f32 %v633, %v698
  %v713 = vmul.f32 %v635, %v699
  %v714 = vmul.f32 %v637, %v700
  %v715 = vmul.f32 %v639, %v701
  %v716 = vmul.f32 %v641, %v702
  %v717 = vmul.f32 %v643, %v703
  %v718 = vmul.f32 %v645, %v704
  %v719 = vmul.f32 %v647, %v705
  %v720 = vmul.f32 %v649, %v706
  %v721 = vmul.f32 %v651, %v707
  %v723 = vsel %vm567, %v708, 0
  %v726 = vsel %vm567, %v709, 0
  %v729 = vsel %vm567, %v710, 0
  %v732 = vsel %vm567, %v711, 0
  %v735 = vsel %vm567, %v712, 0
  %v738 = vsel %vm567, %v713, 0
  %v741 = vsel %vm567, %v714, 0
  %743 = vmatprep.subr.mxu0 0.0
  %744 = vmatpush1.msra.mxu0 0.0
  %745 = vmatprep.subr.mxu0 0.0
  %746 = vmatpush1.msra.mxu0 0.0
  %747 = vmatprep.subr.mxu0 0.0
  %748 = vmatpush1.msra.mxu0 0.0
  %749 = vmatprep.subr.mxu0 0.0
  %750 = vmatpush1.msra.mxu0 0.0
  %751 = vmatprep.subr.mxu0 0.0
  %752 = vmatpush1.msra.mxu0 0.0
  %753 = vmatprep.subr.mxu0 0.0
  %754 = vmatpush1.msra.mxu0 0.0
  %755 = vmatprep.subr.mxu0 0.0
  %756 = vmatpush1.msra.mxu0 0.0
  %757 = vmatprep.subr.mxu0 0.0
  %758 = vmatpush1.msra.mxu0 0.0
  %759 = vmatprep.subr.mxu0 0.0
  %760 = vmatpush1.msra.mxu0 0.0
  %761 = vmatprep.subr.mxu0 0.0
  %762 = vmatpush1.msra.mxu0 %v185
  %763 = vmatprep.subr.mxu0 0.0
  %764 = vmatpush1.msra.mxu0 %v180
  %765 = vmatprep.subr.mxu0 0.0
  %766 = vmatpush1.msra.mxu0 %v175
  %767 = vmatprep.subr.mxu0 0.0
  %768 = vmatpush1.msra.mxu0 %v170
  %769 = vmatprep.subr.mxu0 0.0
  %770 = vmatpush1.msra.mxu0 %v165
  %771 = vmatprep.subr.mxu0 0.0
  %772 = vmatpush1.msra.mxu0 %v160
  %773 = vmatprep.subr.mxu0 0.0
  %774 = vmatpush1.msra.mxu0 %v155
  %775 = vmatprep.subr.mxu0 0.0
  %776 = vmatpush2.msra.mxu0 0.0
  %777 = vmatprep.subr.mxu0 0.0
  %778 = vmatpush2.msra.mxu0 0.0
  %779 = vmatprep.subr.mxu0 0.0
  %780 = vmatpush2.msra.mxu0 0.0
  %781 = vmatprep.subr.mxu0 0.0
  %782 = vmatpush2.msra.mxu0 0.0
  %783 = vmatprep.subr.mxu0 0.0
  %784 = vmatpush2.msra.mxu0 0.0
  %785 = vmatprep.subr.mxu0 0.0
  %786 = vmatpush2.msra.mxu0 0.0
  %787 = vmatprep.subr.mxu0 0.0
  %788 = vmatpush2.msra.mxu0 0.0
  %789 = vmatprep.subr.mxu0 0.0
  %790 = vmatpush2.msra.mxu0 0.0
  %791 = vmatprep.subr.mxu0 0.0
  %792 = vmatpush2.msra.mxu0 0.0
  %793 = vmatprep.subr.mxu0 0.0
  %794 = vmatpush2.msra.mxu0 0.0
  %795 = vmatprep.subr.mxu0 0.0
  %796 = vmatpush2.msra.mxu0 0.0
  %797 = vmatprep.subr.mxu0 0.0
  %798 = vmatpush2.msra.mxu0 0.0
  %799 = vmatprep.subr.mxu0 0.0
  %800 = vmatpush2.msra.mxu0 0.0
  %801 = vmatprep.subr.mxu0 0.0
  %802 = vmatpush2.msra.mxu0 0.0
  %803 = vmatprep.subr.mxu0 0.0
  %804 = vmatpush2.msra.mxu0 0.0
  %805 = vmatprep.subr.mxu0 0.0
  %806 = vmatpush2.msra.mxu0 0.0
  %807 = vmatprep.mubr.f32.mxu0 0.0
  %808 = vmatmul.mubr.f32.gmra.mxu0 %v723
  %v809 = vpop.f32.mrf.mxu0
  %v810 = vadd.f32 0.0, %v809
  %v811 = vpop.f32.mrf.mxu0
  %812 = vmatprep.mubr.f32.mxu0 0.0
  %813 = vmatmul.mubr.f32.gmra.mxu0 %v726
  %v814 = vpop.f32.mrf.mxu0
  %v815 = vadd.f32 0.0, %v814
  %v816 = vpop.f32.mrf.mxu0
  %817 = vmatprep.mubr.f32.mxu0 0.0
  %818 = vmatmul.mubr.f32.gmra.mxu0 %v729
  %v819 = vpop.f32.mrf.mxu0
  %v820 = vadd.f32 0.0, %v819
  %v821 = vpop.f32.mrf.mxu0
  %822 = vmatprep.mubr.f32.mxu0 0.0
  %823 = vmatmul.mubr.f32.gmra.mxu0 %v732
  %v824 = vpop.f32.mrf.mxu0
  %v825 = vadd.f32 0.0, %v824
  %v826 = vpop.f32.mrf.mxu0
  %827 = vmatprep.mubr.f32.mxu0 0.0
  %828 = vmatmul.mubr.f32.gmra.mxu0 %v735
  %v829 = vpop.f32.mrf.mxu0
  %v830 = vadd.f32 0.0, %v829
  %v831 = vpop.f32.mrf.mxu0
  %832 = vmatprep.mubr.f32.mxu0 0.0
  %833 = vmatmul.mubr.f32.gmra.mxu0 %v738
  %v834 = vpop.f32.mrf.mxu0
  %v835 = vadd.f32 0.0, %v834
  %v836 = vpop.f32.mrf.mxu0
  %837 = vmatprep.mubr.f32.mxu0 0.0
  %838 = vmatmul.mubr.f32.gmra.mxu0 %v741
  %v839 = vpop.f32.mrf.mxu0
  %v840 = vadd.f32 0.0, %v839
  %v841 = vpop.f32.mrf.mxu0
  %842 = vdwg.mxu0
  %v844 = vsel %vm567, %v715, 0
  %v847 = vsel %vm567, %v716, 0
  %v850 = vsel %vm567, %v717, 0
  %v853 = vsel %vm567, %v718, 0
  %v856 = vsel %vm567, %v719, 0
  %v859 = vsel %vm567, %v720, 0
  %v862 = vsel %vm567, %v721, 0
  %864 = vmatprep.subr.mxu0 0.0
  %865 = vmatpush1.msra.mxu0 0.0
  %866 = vmatprep.subr.mxu0 0.0
  %867 = vmatpush1.msra.mxu0 0.0
  %868 = vmatprep.subr.mxu0 0.0
  %869 = vmatpush1.msra.mxu0 0.0
  %870 = vmatprep.subr.mxu0 0.0
  %871 = vmatpush1.msra.mxu0 0.0
  %872 = vmatprep.subr.mxu0 0.0
  %873 = vmatpush1.msra.mxu0 0.0
  %874 = vmatprep.subr.mxu0 0.0
  %875 = vmatpush1.msra.mxu0 0.0
  %876 = vmatprep.subr.mxu0 0.0
  %877 = vmatpush1.msra.mxu0 0.0
  %878 = vmatprep.subr.mxu0 0.0
  %879 = vmatpush1.msra.mxu0 0.0
  %880 = vmatprep.subr.mxu0 0.0
  %881 = vmatpush1.msra.mxu0 0.0
  %882 = vmatprep.subr.mxu0 0.0
  %883 = vmatpush1.msra.mxu0 %v220
  %884 = vmatprep.subr.mxu0 0.0
  %885 = vmatpush1.msra.mxu0 %v215
  %886 = vmatprep.subr.mxu0 0.0
  %887 = vmatpush1.msra.mxu0 %v210
  %888 = vmatprep.subr.mxu0 0.0
  %889 = vmatpush1.msra.mxu0 %v205
  %890 = vmatprep.subr.mxu0 0.0
  %891 = vmatpush1.msra.mxu0 %v200
  %892 = vmatprep.subr.mxu0 0.0
  %893 = vmatpush1.msra.mxu0 %v195
  %894 = vmatprep.subr.mxu0 0.0
  %895 = vmatpush1.msra.mxu0 %v190
  %896 = vmatprep.subr.mxu0 0.0
  %897 = vmatpush2.msra.mxu0 0.0
  %898 = vmatprep.subr.mxu0 0.0
  %899 = vmatpush2.msra.mxu0 0.0
  %900 = vmatprep.subr.mxu0 0.0
  %901 = vmatpush2.msra.mxu0 0.0
  %902 = vmatprep.subr.mxu0 0.0
  %903 = vmatpush2.msra.mxu0 0.0
  %904 = vmatprep.subr.mxu0 0.0
  %905 = vmatpush2.msra.mxu0 0.0
  %906 = vmatprep.subr.mxu0 0.0
  %907 = vmatpush2.msra.mxu0 0.0
  %908 = vmatprep.subr.mxu0 0.0
  %909 = vmatpush2.msra.mxu0 0.0
  %910 = vmatprep.subr.mxu0 0.0
  %911 = vmatpush2.msra.mxu0 0.0
  %912 = vmatprep.subr.mxu0 0.0
  %913 = vmatpush2.msra.mxu0 0.0
  %914 = vmatprep.subr.mxu0 0.0
  %915 = vmatpush2.msra.mxu0 0.0
  %916 = vmatprep.subr.mxu0 0.0
  %917 = vmatpush2.msra.mxu0 0.0
  %918 = vmatprep.subr.mxu0 0.0
  %919 = vmatpush2.msra.mxu0 0.0
  %920 = vmatprep.subr.mxu0 0.0
  %921 = vmatpush2.msra.mxu0 0.0
  %922 = vmatprep.subr.mxu0 0.0
  %923 = vmatpush2.msra.mxu0 0.0
  %924 = vmatprep.subr.mxu0 0.0
  %925 = vmatpush2.msra.mxu0 0.0
  %926 = vmatprep.subr.mxu0 0.0
  %927 = vmatpush2.msra.mxu0 0.0
  %928 = vmatprep.mubr.f32.mxu0 0.0
  %929 = vmatmul.mubr.f32.gmra.mxu0 %v844
  %v930 = vpop.f32.mrf.mxu0
  %v931 = vadd.f32 0.0, %v930
  %v932 = vpop.f32.mrf.mxu0
  %933 = vmatprep.mubr.f32.mxu0 0.0
  %934 = vmatmul.mubr.f32.gmra.mxu0 %v847
  %v935 = vpop.f32.mrf.mxu0
  %v936 = vadd.f32 0.0, %v935
  %v937 = vpop.f32.mrf.mxu0
  %938 = vmatprep.mubr.f32.mxu0 0.0
  %939 = vmatmul.mubr.f32.gmra.mxu0 %v850
  %v940 = vpop.f32.mrf.mxu0
  %v941 = vadd.f32 0.0, %v940
  %v942 = vpop.f32.mrf.mxu0
  %943 = vmatprep.mubr.f32.mxu0 0.0
  %944 = vmatmul.mubr.f32.gmra.mxu0 %v853
  %v945 = vpop.f32.mrf.mxu0
  %v946 = vadd.f32 0.0, %v945
  %v947 = vpop.f32.mrf.mxu0
  %948 = vmatprep.mubr.f32.mxu0 0.0
  %949 = vmatmul.mubr.f32.gmra.mxu0 %v856
  %v950 = vpop.f32.mrf.mxu0
  %v951 = vadd.f32 0.0, %v950
  %v952 = vpop.f32.mrf.mxu0
  %953 = vmatprep.mubr.f32.mxu0 0.0
  %954 = vmatmul.mubr.f32.gmra.mxu0 %v859
  %v955 = vpop.f32.mrf.mxu0
  %v956 = vadd.f32 0.0, %v955
  %v957 = vpop.f32.mrf.mxu0
  %958 = vmatprep.mubr.f32.mxu0 0.0
  %959 = vmatmul.mubr.f32.gmra.mxu0 %v862
  %v960 = vpop.f32.mrf.mxu0
  %v961 = vadd.f32 0.0, %v960
  %v962 = vpop.f32.mrf.mxu0
  %963 = vdwg.mxu0
  %v964 = vld [vmem:[%s4] sm:$0xff]
  %v966 = vsel %vm258, %v810, 0
  %v969 = vsel %vm258, %v815, 0
  %v972 = vsel %vm258, %v820, 0
  %v975 = vsel %vm258, %v825, 0
  %v978 = vsel %vm258, %v830, 0
  %v981 = vsel %vm258, %v835, 0
  %v984 = vsel %vm258, %v840, 0
  %v987 = vsel %vm258, %v931, 0
  %v990 = vsel %vm258, %v936, 0
  %v993 = vsel %vm258, %v941, 0
  %v996 = vsel %vm258, %v946, 0
  %v999 = vsel %vm258, %v951, 0
  %v1002 = vsel %vm258, %v956, 0
  %v1005 = vsel %vm258, %v961, 0
  %1007 = vmatprep.subr.mxu0 0.0
  %1008 = vmatpush1.msra.mxu0 0.0
  %1009 = vmatprep.subr.mxu0 0.0
  %1010 = vmatpush1.msra.mxu0 0.0
  %1011 = vmatprep.subr.mxu0 0.0
  %1012 = vmatpush1.msra.mxu0 0.0
  %1013 = vmatprep.subr.mxu0 0.0
  %1014 = vmatpush1.msra.mxu0 0.0
  %1015 = vmatprep.subr.mxu0 0.0
  %1016 = vmatpush1.msra.mxu0 0.0
  %1017 = vmatprep.subr.mxu0 0.0
  %1018 = vmatpush1.msra.mxu0 0.0
  %1019 = vmatprep.subr.mxu0 0.0
  %1020 = vmatpush1.msra.mxu0 0.0
  %1021 = vmatprep.subr.mxu0 0.0
  %1022 = vmatpush1.msra.mxu0 0.0
  %1023 = vmatprep.subr.mxu0 0.0
  %1024 = vmatpush1.msra.mxu0 0.0
  %1025 = vmatprep.subr.mxu0 0.0
  %1026 = vmatpush1.msra.mxu0 0.0
  %1027 = vmatprep.subr.mxu0 0.0
  %1028 = vmatpush1.msra.mxu0 0.0
  %1029 = vmatprep.subr.mxu0 0.0
  %1030 = vmatpush1.msra.mxu0 0.0
  %1031 = vmatprep.subr.mxu0 0.0
  %1032 = vmatpush1.msra.mxu0 0.0
  %1033 = vmatprep.subr.mxu0 0.0
  %1034 = vmatpush1.msra.mxu0 0.0
  %1035 = vmatprep.subr.mxu0 0.0
  %1036 = vmatpush1.msra.mxu0 0.0
  %1037 = vmatprep.subr.mxu0 0.0
  %1038 = vmatpush1.msra.mxu0 %v964
  %1039 = vmatprep.subr.mxu0 0.0
  %1040 = vmatpush2.msra.mxu0 0.0
  %1041 = vmatprep.subr.mxu0 0.0
  %1042 = vmatpush2.msra.mxu0 0.0
  %1043 = vmatprep.subr.mxu0 0.0
  %1044 = vmatpush2.msra.mxu0 0.0
  %1045 = vmatprep.subr.mxu0 0.0
  %1046 = vmatpush2.msra.mxu0 0.0
  %1047 = vmatprep.subr.mxu0 0.0
  %1048 = vmatpush2.msra.mxu0 0.0
  %1049 = vmatprep.subr.mxu0 0.0
  %1050 = vmatpush2.msra.mxu0 0.0
  %1051 = vmatprep.subr.mxu0 0.0
  %1052 = vmatpush2.msra.mxu0 0.0
  %1053 = vmatprep.subr.mxu0 0.0
  %1054 = vmatpush2.msra.mxu0 0.0
  %1055 = vmatprep.subr.mxu0 0.0
  %1056 = vmatpush2.msra.mxu0 0.0
  %1057 = vmatprep.subr.mxu0 0.0
  %1058 = vmatpush2.msra.mxu0 0.0
  %1059 = vmatprep.subr.mxu0 0.0
  %1060 = vmatpush2.msra.mxu0 0.0
  %1061 = vmatprep.subr.mxu0 0.0
  %1062 = vmatpush2.msra.mxu0 0.0
  %1063 = vmatprep.subr.mxu0 0.0
  %1064 = vmatpush2.msra.mxu0 0.0
  %1065 = vmatprep.subr.mxu0 0.0
  %1066 = vmatpush2.msra.mxu0 0.0
  %1067 = vmatprep.subr.mxu0 0.0
  %1068 = vmatpush2.msra.mxu0 0.0
  %1069 = vmatprep.subr.mxu0 0.0
  %1070 = vmatpush2.msra.mxu0 0.0
  %1071 = vmatprep.mubr.f32.mxu0 0.0
  %1072 = vmatmul.mubr.f32.gmra.mxu0 %v966
  %v1073 = vpop.f32.mrf.mxu0
  %v1074 = vadd.f32 0.0, %v1073
  %v1075 = vpop.f32.mrf.mxu0
  %1076 = vmatprep.mubr.f32.mxu0 0.0
  %1077 = vmatmul.mubr.f32.gmra.mxu0 %v969
  %v1078 = vpop.f32.mrf.mxu0
  %v1079 = vadd.f32 0.0, %v1078
  %v1080 = vpop.f32.mrf.mxu0
  %1081 = vmatprep.mubr.f32.mxu0 0.0
  %1082 = vmatmul.mubr.f32.gmra.mxu0 %v972
  %v1083 = vpop.f32.mrf.mxu0
  %v1084 = vadd.f32 0.0, %v1083
  %v1085 = vpop.f32.mrf.mxu0
  %1086 = vmatprep.mubr.f32.mxu0 0.0
  %1087 = vmatmul.mubr.f32.gmra.mxu0 %v975
  %v1088 = vpop.f32.mrf.mxu0
  %v1089 = vadd.f32 0.0, %v1088
  %v1090 = vpop.f32.mrf.mxu0
  %1091 = vmatprep.mubr.f32.mxu0 0.0
  %1092 = vmatmul.mubr.f32.gmra.mxu0 %v978
  %v1093 = vpop.f32.mrf.mxu0
  %v1094 = vadd.f32 0.0, %v1093
  %v1095 = vpop.f32.mrf.mxu0
  %1096 = vmatprep.mubr.f32.mxu0 0.0
  %1097 = vmatmul.mubr.f32.gmra.mxu0 %v981
  %v1098 = vpop.f32.mrf.mxu0
  %v1099 = vadd.f32 0.0, %v1098
  %v1100 = vpop.f32.mrf.mxu0
  %1101 = vmatprep.mubr.f32.mxu0 0.0
  %1102 = vmatmul.mubr.f32.gmra.mxu0 %v984
  %v1103 = vpop.f32.mrf.mxu0
  %v1104 = vadd.f32 0.0, %v1103
  %v1105 = vpop.f32.mrf.mxu0
  %1106 = vmatprep.mubr.f32.mxu0 0.0
  %1107 = vmatmul.mubr.f32.gmra.mxu0 %v987
  %v1108 = vpop.f32.mrf.mxu0
  %v1109 = vadd.f32 0.0, %v1108
  %v1110 = vpop.f32.mrf.mxu0
  %1111 = vmatprep.mubr.f32.mxu0 0.0
  %1112 = vmatmul.mubr.f32.gmra.mxu0 %v990
  %v1113 = vpop.f32.mrf.mxu0
  %v1114 = vadd.f32 0.0, %v1113
  %v1115 = vpop.f32.mrf.mxu0
  %1116 = vmatprep.mubr.f32.mxu0 0.0
  %1117 = vmatmul.mubr.f32.gmra.mxu0 %v993
  %v1118 = vpop.f32.mrf.mxu0
  %v1119 = vadd.f32 0.0, %v1118
  %v1120 = vpop.f32.mrf.mxu0
  %1121 = vmatprep.mubr.f32.mxu0 0.0
  %1122 = vmatmul.mubr.f32.gmra.mxu0 %v996
  %v1123 = vpop.f32.mrf.mxu0
  %v1124 = vadd.f32 0.0, %v1123
  %v1125 = vpop.f32.mrf.mxu0
  %1126 = vmatprep.mubr.f32.mxu0 0.0
  %1127 = vmatmul.mubr.f32.gmra.mxu0 %v999
  %v1128 = vpop.f32.mrf.mxu0
  %v1129 = vadd.f32 0.0, %v1128
  %v1130 = vpop.f32.mrf.mxu0
  %1131 = vmatprep.mubr.f32.mxu0 0.0
  %1132 = vmatmul.mubr.f32.gmra.mxu0 %v1002
  %v1133 = vpop.f32.mrf.mxu0
  %v1134 = vadd.f32 0.0, %v1133
  %v1135 = vpop.f32.mrf.mxu0
  %1136 = vmatprep.mubr.f32.mxu0 0.0
  %1137 = vmatmul.mubr.f32.gmra.mxu0 %v1005
  %v1138 = vpop.f32.mrf.mxu0
  %v1139 = vadd.f32 0.0, %v1138
  %v1140 = vpop.f32.mrf.mxu0
  %1141 = vdwg.mxu0
  %v1142 = vld [vmem:[%s1] sm:$0xff]
  %v1143 = vld [vmem:[%s1 + $0x8] sm:$0xff]
  %v1144 = vld [vmem:[%s1 + $0x10] sm:$0xff]
  %v1145 = vld [vmem:[%s1 + $0x18] sm:$0xff]
  %v1146 = vld [vmem:[%s1 + $0x20] sm:$0xff]
  %v1147 = vld [vmem:[%s1 + $0x28] sm:$0xff]
  %v1148 = vld [vmem:[%s1 + $0x30] sm:$0xff]
  %v1149 = vld [vmem:[%s1 + $0x38] sm:$0xff]
  %v1150 = vld [vmem:[%s1 + $0x40] sm:$0xff]
  %v1151 = vld [vmem:[%s1 + $0x48] sm:$0xff]
  %v1152 = vld [vmem:[%s1 + $0x50] sm:$0xff]
  %v1153 = vld [vmem:[%s1 + $0x58] sm:$0xff]
  %v1154 = vld [vmem:[%s1 + $0x60] sm:$0xff]
  %v1155 = vld [vmem:[%s1 + $0x68] sm:$0xff]
  %1157 = vset.pattern.permute.xlu0 0
  %1158 = vperm.xlu0 %1157, %v1142
  %v1159 = vpop.permute.xlu0 %1158
  %1162 = vset.pattern.permute.xlu0 0
  %1163 = vperm.xlu0 %1162, %v1143
  %v1164 = vpop.permute.xlu0 %1163
  %1167 = vset.pattern.permute.xlu0 0
  %1168 = vperm.xlu0 %1167, %v1144
  %v1169 = vpop.permute.xlu0 %1168
  %1172 = vset.pattern.permute.xlu0 0
  %1173 = vperm.xlu0 %1172, %v1145
  %v1174 = vpop.permute.xlu0 %1173
  %1177 = vset.pattern.permute.xlu0 0
  %1178 = vperm.xlu0 %1177, %v1146
  %v1179 = vpop.permute.xlu0 %1178
  %1182 = vset.pattern.permute.xlu0 0
  %1183 = vperm.xlu0 %1182, %v1147
  %v1184 = vpop.permute.xlu0 %1183
  %1187 = vset.pattern.permute.xlu0 0
  %1188 = vperm.xlu0 %1187, %v1148
  %v1189 = vpop.permute.xlu0 %1188
  %1192 = vset.pattern.permute.xlu0 0
  %1193 = vperm.xlu0 %1192, %v1149
  %v1194 = vpop.permute.xlu0 %1193
  %1197 = vset.pattern.permute.xlu0 0
  %1198 = vperm.xlu0 %1197, %v1150
  %v1199 = vpop.permute.xlu0 %1198
  %1202 = vset.pattern.permute.xlu0 0
  %1203 = vperm.xlu0 %1202, %v1151
  %v1204 = vpop.permute.xlu0 %1203
  %1207 = vset.pattern.permute.xlu0 0
  %1208 = vperm.xlu0 %1207, %v1152
  %v1209 = vpop.permute.xlu0 %1208
  %1212 = vset.pattern.permute.xlu0 0
  %1213 = vperm.xlu0 %1212, %v1153
  %v1214 = vpop.permute.xlu0 %1213
  %1217 = vset.pattern.permute.xlu0 0
  %1218 = vperm.xlu0 %1217, %v1154
  %v1219 = vpop.permute.xlu0 %1218
  %1222 = vset.pattern.permute.xlu0 0
  %1223 = vperm.xlu0 %1222, %v1155
  %v1224 = vpop.permute.xlu0 %1223
  %v1226 = vmul.f32 %v1159, %v1074
  %v1227 = vmul.f32 %v1164, %v1079
  %v1228 = vmul.f32 %v1169, %v1084
  %v1229 = vmul.f32 %v1174, %v1089
  %v1230 = vmul.f32 %v1179, %v1094
  %v1231 = vmul.f32 %v1184, %v1099
  %v1232 = vmul.f32 %v1189, %v1104
  %v1233 = vmul.f32 %v1194, %v1109
  %v1234 = vmul.f32 %v1199, %v1114
  %v1235 = vmul.f32 %v1204, %v1119
  %v1236 = vmul.f32 %v1209, %v1124
  %v1237 = vmul.f32 %v1214, %v1129
  %v1238 = vmul.f32 %v1219, %v1134
  %v1239 = vmul.f32 %v1224, %v1139
  %v1240 = vadd.f32 %v1226, %v22
  %v1241 = vadd.f32 %v1227, %v23
  %v1242 = vadd.f32 %v1228, %v24
  %v1243 = vadd.f32 %v1229, %v25
  %v1244 = vadd.f32 %v1230, %v26
  %v1245 = vadd.f32 %v1231, %v27
  %v1246 = vadd.f32 %v1232, %v28
  %v1247 = vadd.f32 %v1233, %v29
  %v1248 = vadd.f32 %v1234, %v30
  %v1249 = vadd.f32 %v1235, %v31
  %v1250 = vadd.f32 %v1236, %v32
  %v1251 = vadd.f32 %v1237, %v33
  %v1252 = vadd.f32 %v1238, %v34
  %v1253 = vadd.f32 %v1239, %v35
  %1254 = vst.msk [vmem:[%s5] sm:$0xff] %vm45, %v1240
  %1255 = vst.msk [vmem:[%s5 + $0x8] sm:$0xff] %vm45, %v1241
  %1256 = vst.msk [vmem:[%s5 + $0x10] sm:$0xff] %vm45, %v1242
  %1257 = vst.msk [vmem:[%s5 + $0x18] sm:$0xff] %vm45, %v1243
  %1258 = vst.msk [vmem:[%s5 + $0x20] sm:$0xff] %vm45, %v1244
  %1259 = vst.msk [vmem:[%s5 + $0x28] sm:$0xff] %vm45, %v1245
  %1260 = vst.msk [vmem:[%s5 + $0x30] sm:$0xff] %vm45, %v1246
  %1261 = vst.msk [vmem:[%s5 + $0x38] sm:$0xff] %vm45, %v1247
  %1262 = vst.msk [vmem:[%s5 + $0x40] sm:$0xff] %vm45, %v1248
  %1263 = vst.msk [vmem:[%s5 + $0x48] sm:$0xff] %vm45, %v1249
  %1264 = vst.msk [vmem:[%s5 + $0x50] sm:$0xff] %vm45, %v1250
  %1265 = vst.msk [vmem:[%s5 + $0x58] sm:$0xff] %vm45, %v1251
  %1266 = vst.msk [vmem:[%s5 + $0x60] sm:$0xff] %vm45, %v1252
  %1267 = vst.msk [vmem:[%s5 + $0x68] sm:$0xff] %vm45, %v1253
  %1268 = vst.msk [vmem:[%s6] sm:$0xff] %vm45, %v1074
  %1269 = vst.msk [vmem:[%s6 + $0x8] sm:$0xff] %vm45, %v1079
  %1270 = vst.msk [vmem:[%s6 + $0x10] sm:$0xff] %vm45, %v1084
  %1271 = vst.msk [vmem:[%s6 + $0x18] sm:$0xff] %vm45, %v1089
  %1272 = vst.msk [vmem:[%s6 + $0x20] sm:$0xff] %vm45, %v1094
  %1273 = vst.msk [vmem:[%s6 + $0x28] sm:$0xff] %vm45, %v1099
  %1274 = vst.msk [vmem:[%s6 + $0x30] sm:$0xff] %vm45, %v1104
  %1275 = vst.msk [vmem:[%s6 + $0x38] sm:$0xff] %vm45, %v1109
  %1276 = vst.msk [vmem:[%s6 + $0x40] sm:$0xff] %vm45, %v1114
  %1277 = vst.msk [vmem:[%s6 + $0x48] sm:$0xff] %vm45, %v1119
  %1278 = vst.msk [vmem:[%s6 + $0x50] sm:$0xff] %vm45, %v1124
  %1279 = vst.msk [vmem:[%s6 + $0x58] sm:$0xff] %vm45, %v1129
  %1280 = vst.msk [vmem:[%s6 + $0x60] sm:$0xff] %vm45, %v1134
  %1281 = vst.msk [vmem:[%s6 + $0x68] sm:$0xff] %vm45, %v1139
  // Predicated region
  $region22: #{modulated_att_forward.1} parent=0 // pred_check
    _
  $region23: #{modulated_att_forward.1} parent=0 // pred_check_branch
    %1283 = sbr.rel (0) target = $region25
  $region24: #{modulated_att_forward.1} parent=0 // pred_region
    _
  $region25: #{modulated_att_forward.1} parent=0 // pred_fallthru
    _
  // Predicated region
  $region26: #{modulated_att_forward.1} parent=0 // pred_check
    _
  $region27: #{modulated_att_forward.1} parent=0 // pred_check_branch
    %1285 = sbr.rel (0) target = $region29
  $region28: #{modulated_att_forward.1} parent=0 // pred_region
    _
  $region29: #{modulated_att_forward.1} parent=0 // pred_fallthru
    _
  // Predicated region
  $region30: #{modulated_att_forward.1} parent=0 // pred_check
    _
  $region31: #{modulated_att_forward.1} parent=0 // pred_check_branch
    %1287 = sbr.rel (0) target = $region33
  $region32: #{modulated_att_forward.1} parent=0 // pred_region
    _
  $region33: #{modulated_att_forward.1} parent=0 // pred_fallthru
    _
  // Predicated region
  $region34: #{modulated_att_forward.1} parent=0 // pred_check
    _
  $region35: #{modulated_att_forward.1} parent=0 // pred_check_branch
    %1289 = sbr.rel (0) target = $region37
  $region36: #{modulated_att_forward.1} parent=0 // pred_region
    _
  $region37: #{modulated_att_forward.1} parent=0 // pred_fallthru
    _

</llo_original>
